<compile_context>
chip_gen: v7x
topology: tpu7x:2x2x1
jax: 0.10.0
libtpu: 0.0.40
codegen_flags: <defaults>
</compile_context>

<pallas_src>
import functools

import jax
import jax.numpy as jnp
from jax import lax
from jax.experimental import pallas as pl
from jax.experimental.pallas import tpu as pltpu

NEG_SLOPE = 0.01  # F.leaky_relu default


def _leaky_relu(x):
    return jnp.where(x >= 0, x, NEG_SLOPE * x)


def _round_up(x, m):
    return (x + m - 1) // m * m


def _fused_lstm_kernel(x_ref, w1_ref, b1_ref, w2_ref, b2_ref,
                       wih_ref, bgate_ref, whh_ref, w3_ref, b3_ref,
                       out_ref, gx_buf, h_buf, *, seq, Bc, H):
    """Entire forward for one batch chunk.

    Phase 1: batched feed-forward projection for all timesteps (bf16 MXU).
    Phase 2: sequential LSTM recurrence (fori_loop, vreg-carried f32 h/c).
    Phase 3: batched fc3 over all timesteps, single lane-dense store.
    """
    f32 = jnp.float32
    bf16 = jnp.bfloat16
    Gp = whh_ref.shape[1]            # packed gate width (multiple of 128)
    I = x_ref.shape[-1]

    # ---------------- Phase 1: non-recurrent, batched over seq*Bc rows -------
    x = x_ref[...].reshape(seq * Bc, I).astype(bf16)
    a1 = _leaky_relu(
        jnp.dot(x, w1_ref[...], preferred_element_type=f32) + b1_ref[...])
    a2 = _leaky_relu(
        jnp.dot(a1.astype(bf16), w2_ref[...], preferred_element_type=f32)
        + b2_ref[...])
    # Input-driven gate pre-activations for all timesteps incl. combined bias.
    gx_buf[...] = (jnp.dot(a2.astype(bf16), wih_ref[...],
                           preferred_element_type=f32) + bgate_ref[...])

    # ---------------- Phase 2: recurrence ------------------------------------
    whh = whh_ref[...]               # hoisted, (Gp, Gp) bf16, rows >= H are 0

    def body(t, carry):
        h, c = carry                 # f32 (Bc, Gp); only lanes [0:H] are "real"
        row = pl.multiple_of(t * Bc, Bc)          # tile-aligned offset
        gates = gx_buf[pl.ds(row, Bc), :] + jnp.dot(
            h.astype(bf16), whh, preferred_element_type=f32)   # (Bc, Gp) f32
        # PyTorch LSTMCell gate order i,f,g,o packed at lanes [k*H:(k+1)*H].
        sg = jax.nn.sigmoid(gates)   # one EUP pass covers i/f/o
        tg = jnp.tanh(gates)         # one EUP pass covers g
        i_g = sg                                            # already at lanes 0..H
        f_g = pltpu.roll(sg, shift=Gp - 1 * H, axis=1)      # bring f to lanes 0..H
        g_g = pltpu.roll(tg, shift=Gp - 2 * H, axis=1)
        o_g = pltpu.roll(sg, shift=Gp - 3 * H, axis=1)
        # Lanes >= H hold bounded junk; W_hh_p / W3_p rows >= H are zero so it
        # never reaches real outputs or real gate pre-activations.
        c_new = f_g * c + i_g * g_g
        h_new = o_g * jnp.tanh(c_new)
        h_buf[pl.ds(row, Bc), :] = h_new                    # full (8,128) tiles
        return h_new, c_new

    h0 = jnp.zeros((Bc, Gp), f32)
    c0 = jnp.zeros((Bc, Gp), f32)
    lax.fori_loop(0, seq, body, (h0, c0), unroll=min(8, seq))

    # ---------------- Phase 3: batched fc3, one lane-dense store -------------
    y = (jnp.dot(h_buf[...].astype(bf16), w3_ref[...],
                 preferred_element_type=f32) + b3_ref[...])
    out_ref[...] = y.reshape(seq, Bc, y.shape[-1]).astype(out_ref.dtype)


def lstm2_forward(inputs, params):
    """inputs: (seq, batch, input_size) f32 -> (seq, batch, output_size) f32."""
    seq, B, I = inputs.shape
    (w1, b1, w2, b2, wih, bih, whh, bhh, w3, b3) = params
    Hd = w1.shape[1]                 # hidden_size
    Q = w2.shape[1]                  # hidden_size // 4
    H = whh.shape[0]                 # hidden_size // 8
    G = 4 * H
    O = w3.shape[1]

    Hd_p = _round_up(Hd, 128)        # fc1 width -> lane-dense
    Q_p = _round_up(Q, 128)          # fc2 width -> lane-dense
    Gp = _round_up(G, 128)           # all 4 gates packed into one lane block
    O_p = _round_up(O, 128)          # lane-dense output store

    # Batch: pad to full sublane tiles; split across 2 chunks (-> 2 TCs on
    # v7x via the "parallel" grid axis) only when each chunk keeps >= 8 rows.
    num_chunks = 2 if _round_up(B, 8) >= 16 else 1
    Bp = _round_up(B, 8 * num_chunks)
    Bc = Bp // num_chunks

    f32 = jnp.float32
    bf16 = jnp.bfloat16

    # Pad batch rows (padded rows carry independent junk state; sliced off).
    x3 = jnp.zeros((seq, Bp, I), f32).at[:, :B, :].set(inputs)

    # Zero-padded weights: matmul operands in bf16, biases stay f32.
    w1_p = jnp.zeros((I, Hd_p), f32).at[:, :Hd].set(w1).astype(bf16)
    b1_p = jnp.zeros((1, Hd_p), f32).at[:, :Hd].set(b1)
    w2_p = jnp.zeros((Hd_p, Q_p), f32).at[:Hd, :Q].set(w2).astype(bf16)
    b2_p = jnp.zeros((1, Q_p), f32).at[:, :Q].set(b2)
    wih_p = jnp.zeros((Q_p, Gp), f32).at[:Q, :G].set(wih).astype(bf16)
    bgate = jnp.zeros((1, Gp), f32).at[:, :G].set(bih + bhh)
    whh_p = jnp.zeros((Gp, Gp), f32).at[:H, :G].set(whh).astype(bf16)
    w3_p = jnp.zeros((Gp, O_p), f32).at[:H, :O].set(w3).astype(bf16)
    b3_p = jnp.zeros((1, O_p), f32).at[:, :O].set(b3)

    kernel = functools.partial(_fused_lstm_kernel, seq=seq, Bc=Bc, H=H)

    in_specs = [
        pl.BlockSpec((seq, Bc, I), lambda b: (0, b, 0)),
        pl.BlockSpec(w1_p.shape, lambda b: (0, 0)),
        pl.BlockSpec(b1_p.shape, lambda b: (0, 0)),
        pl.BlockSpec(w2_p.shape, lambda b: (0, 0)),
        pl.BlockSpec(b2_p.shape, lambda b: (0, 0)),
        pl.BlockSpec(wih_p.shape, lambda b: (0, 0)),
        pl.BlockSpec(bgate.shape, lambda b: (0, 0)),
        pl.BlockSpec(whh_p.shape, lambda b: (0, 0)),
        pl.BlockSpec(w3_p.shape, lambda b: (0, 0)),
        pl.BlockSpec(b3_p.shape, lambda b: (0, 0)),
    ]
    out_specs = pl.BlockSpec((seq, Bc, O_p), lambda b: (0, b, 0))

    scratch_shapes = [
        pltpu.VMEM((seq * Bc, Gp), f32),   # precomputed input-driven gates
        pltpu.VMEM((seq * Bc, Gp), f32),   # all h_t for the batched fc3
    ]

    # VMEM budget sized to the real buffers (double-buffer + slack), clamped.
    weight_bytes = sum(a.size * a.dtype.itemsize for a in
                       (w1_p, b1_p, w2_p, b2_p, wih_p, bgate, whh_p, w3_p, b3_p))
    buf_bytes = (x3.size * 4 + weight_bytes + seq * Bp * O_p * 4
                 + 2 * seq * Bc * Gp * 4)
    vmem_limit = int(min(96 * 2**20, max(16 * 2**20, 2 * buf_bytes + 4 * 2**20)))

    out3 = pl.pallas_call(
        kernel,
        out_shape=jax.ShapeDtypeStruct((seq, Bp, O_p), f32),
        grid=(num_chunks,),
        in_specs=in_specs,
        out_specs=out_specs,
        scratch_shapes=scratch_shapes,
        compiler_params=pltpu.CompilerParams(
            dimension_semantics=("parallel",),
            vmem_limit_bytes=vmem_limit),
    )(x3, w1_p, b1_p, w2_p, b2_p, wih_p, bgate, whh_p, w3_p, b3_p)

    return out3[:, :B, :O]


def make_params(key, input_size, output_size, hidden_size):
    """Deterministic synthetic parameters. Weights stored (in,out); biases (1,out)."""
    h4 = hidden_size // 4
    h8 = hidden_size // 8
    ks = jax.random.split(key, 10)

    def w(k, shape, scale=0.1):
        return (scale * jax.random.normal(k, shape)).astype(jnp.float32)

    w1 = w(ks[0], (input_size, hidden_size))
    b1 = w(ks[1], (1, hidden_size))
    w2 = w(ks[2], (hidden_size, h4))
    b2 = w(ks[3], (1, h4))
    wih = w(ks[4], (h4, 4 * h8))
    bih = w(ks[5], (1, 4 * h8))
    whh = w(ks[6], (h8, 4 * h8))
    bhh = w(ks[7], (1, 4 * h8))
    w3 = w(ks[8], (h8, output_size))
    b3 = w(ks[9], (1, output_size))
    return (w1, b1, w2, b2, wih, bih, whh, bhh, w3, b3)


def reference_forward(inputs, params):
    """Pure-JAX f32 reference reproducing the PyTorch eval-mode forward."""
    (w1, b1, w2, b2, wih, bih, whh, bhh, w3, b3) = params
    B = inputs.shape[1]
    H = whh.shape[0]

    def step(carry, x):
        h, c = carry
        a1 = _leaky_relu(x @ w1 + b1)
        a2 = _leaky_relu(a1 @ w2 + b2)
        gates = a2 @ wih + bih + h @ whh + bhh
        i_g = jax.nn.sigmoid(gates[:, 0 * H:1 * H])
        f_g = jax.nn.sigmoid(gates[:, 1 * H:2 * H])
        g_g = jnp.tanh(gates[:, 2 * H:3 * H])
        o_g = jax.nn.sigmoid(gates[:, 3 * H:4 * H])
        c_new = f_g * c + i_g * g_g
        h_new = o_g * jnp.tanh(c_new)
        y = h_new @ w3 + b3
        return (h_new, c_new), y

    init = (jnp.zeros((B, H), jnp.float32), jnp.zeros((B, H), jnp.float32))
    _, ys = jax.lax.scan(step, init, inputs)
    return ys


if __name__ == "__main__":
    key = jax.random.PRNGKey(0)
    kx, kp = jax.random.split(key)

    input_size = 8
    output_size = 4
    hidden_size = 20 * input_size    # default from __init__
    seq, batch = 8, 2

    inputs = jax.random.normal(kx, (seq, batch, input_size), dtype=jnp.float32)
    params = make_params(kp, input_size, output_size, hidden_size)

    out = lstm2_forward(inputs, params)
    out = jax.block_until_ready(out)

    ref = jax.block_until_ready(reference_forward(inputs, params))
    assert out.shape == (seq, batch, output_size)
    assert bool(jnp.all(jnp.isfinite(out)))
    # bf16 MXU operands (f32 accumulation) vs pure-f32 reference -> loosened tol.
    assert jnp.allclose(out, ref, atol=2e-2, rtol=2e-2), "mismatch vs JAX reference"

    print("KERNEL_OK")
</pallas_src>

<mosaic_0001>
module attributes {stable_mosaic.version = 11 : i64} {
  func.func @_fused_lstm_kernel(%arg0: i32, %arg1: memref<8x8x8xf32, #tpu.memory_space<vmem>>, %arg2: memref<8x256xbf16, #tpu.memory_space<vmem>>, %arg3: memref<1x256xf32, #tpu.memory_space<vmem>>, %arg4: memref<256x128xbf16, #tpu.memory_space<vmem>>, %arg5: memref<1x128xf32, #tpu.memory_space<vmem>>, %arg6: memref<128x128xbf16, #tpu.memory_space<vmem>>, %arg7: memref<1x128xf32, #tpu.memory_space<vmem>>, %arg8: memref<128x128xbf16, #tpu.memory_space<vmem>>, %arg9: memref<128x128xbf16, #tpu.memory_space<vmem>>, %arg10: memref<1x128xf32, #tpu.memory_space<vmem>>, %arg11: memref<8x8x128xf32, #tpu.memory_space<vmem>>, %arg12: memref<64x128xf32, #tpu.memory_space<vmem>>, %arg13: memref<64x128xf32, #tpu.memory_space<vmem>>) attributes {dimension_semantics = [#tpu.dimension_semantics<parallel>], iteration_bounds = array<i64: 1>, scalar_prefetch = 0 : i64, scratch_operands = 2 : i64, tpu.core_type = #tpu.core_type<tc>, window_params = [{transform_indices = @transform_0, window_bounds = array<i64: 8, 8, 8>}, {pipeline_mode = #tpu.pipeline_mode<synchronous>, transform_indices = @transform_1, window_bounds = array<i64: 8, 256>}, {pipeline_mode = #tpu.pipeline_mode<synchronous>, transform_indices = @transform_2, window_bounds = array<i64: 1, 256>}, {pipeline_mode = #tpu.pipeline_mode<synchronous>, transform_indices = @transform_3, window_bounds = array<i64: 256, 128>}, {pipeline_mode = #tpu.pipeline_mode<synchronous>, transform_indices = @transform_4, window_bounds = array<i64: 1, 128>}, {pipeline_mode = #tpu.pipeline_mode<synchronous>, transform_indices = @transform_5, window_bounds = array<i64: 128, 128>}, {pipeline_mode = #tpu.pipeline_mode<synchronous>, transform_indices = @transform_6, window_bounds = array<i64: 1, 128>}, {pipeline_mode = #tpu.pipeline_mode<synchronous>, transform_indices = @transform_7, window_bounds = array<i64: 128, 128>}, {pipeline_mode = #tpu.pipeline_mode<synchronous>, transform_indices = @transform_8, window_bounds = array<i64: 128, 128>}, {pipeline_mode = #tpu.pipeline_mode<synchronous>, transform_indices = @transform_9, window_bounds = array<i64: 1, 128>}, {transform_indices = @transform_10, window_bounds = array<i64: 8, 8, 128>}]} {
    %c0 = arith.constant 0 : index
    %c0_0 = arith.constant 0 : index
    %c0_1 = arith.constant 0 : index
    %0 = vector.load %arg1[%c0, %c0_0, %c0_1] : memref<8x8x8xf32, #tpu.memory_space<vmem>>, vector<8x8x8xf32>
    %1 = vector.shape_cast %0 : vector<8x8x8xf32> to vector<64x8xf32>
    %2 = arith.truncf %1 : vector<64x8xf32> to vector<64x8xbf16>
    %c0_2 = arith.constant 0 : index
    %c0_3 = arith.constant 0 : index
    %3 = vector.load %arg2[%c0_2, %c0_3] : memref<8x256xbf16, #tpu.memory_space<vmem>>, vector<8x256xbf16>
    %cst = arith.constant dense<0.000000e+00> : vector<64x256xf32>
    %4 = tpu.matmul %2, %3, %cst {dimension_numbers = #tpu.dot_dimension_numbers<[1], [0], [0], [1], [0, 0, 1, 1], [], []>} : vector<64x8xbf16>, vector<8x256xbf16>, vector<64x256xf32> -> vector<64x256xf32>
    %c0_4 = arith.constant 0 : index
    %c0_5 = arith.constant 0 : index
    %5 = vector.load %arg3[%c0_4, %c0_5] : memref<1x256xf32, #tpu.memory_space<vmem>>, vector<1x256xf32>
    %6 = vector.broadcast %5 : vector<1x256xf32> to vector<64x256xf32>
    %7 = arith.addf %4, %6 : vector<64x256xf32>
    %cst_6 = arith.constant 0.000000e+00 : f32
    %8 = vector.broadcast %cst_6 : f32 to vector<64x256xf32>
    %9 = arith.cmpf oge, %7, %8 : vector<64x256xf32>
    %cst_7 = arith.constant 0.00999999977 : f32
    %10 = vector.broadcast %cst_7 : f32 to vector<64x256xf32>
    %11 = arith.mulf %10, %7 : vector<64x256xf32>
    %12 = arith.select %9, %7, %11 : vector<64x256xi1>, vector<64x256xf32>
    %13 = arith.truncf %12 : vector<64x256xf32> to vector<64x256xbf16>
    %c0_8 = arith.constant 0 : index
    %c0_9 = arith.constant 0 : index
    %14 = vector.load %arg4[%c0_8, %c0_9] : memref<256x128xbf16, #tpu.memory_space<vmem>>, vector<256x128xbf16>
    %cst_10 = arith.constant dense<0.000000e+00> : vector<64x128xf32>
    %15 = tpu.matmul %13, %14, %cst_10 {dimension_numbers = #tpu.dot_dimension_numbers<[1], [0], [0], [1], [0, 0, 1, 1], [], []>} : vector<64x256xbf16>, vector<256x128xbf16>, vector<64x128xf32> -> vector<64x128xf32>
    %c0_11 = arith.constant 0 : index
    %c0_12 = arith.constant 0 : index
    %16 = vector.load %arg5[%c0_11, %c0_12] : memref<1x128xf32, #tpu.memory_space<vmem>>, vector<1x128xf32>
    %17 = vector.broadcast %16 : vector<1x128xf32> to vector<64x128xf32>
    %18 = arith.addf %15, %17 : vector<64x128xf32>
    %cst_13 = arith.constant 0.000000e+00 : f32
    %19 = vector.broadcast %cst_13 : f32 to vector<64x128xf32>
    %20 = arith.cmpf oge, %18, %19 : vector<64x128xf32>
    %cst_14 = arith.constant 0.00999999977 : f32
    %21 = vector.broadcast %cst_14 : f32 to vector<64x128xf32>
    %22 = arith.mulf %21, %18 : vector<64x128xf32>
    %23 = arith.select %20, %18, %22 : vector<64x128xi1>, vector<64x128xf32>
    %24 = arith.truncf %23 : vector<64x128xf32> to vector<64x128xbf16>
    %c0_15 = arith.constant 0 : index
    %c0_16 = arith.constant 0 : index
    %25 = vector.load %arg6[%c0_15, %c0_16] : memref<128x128xbf16, #tpu.memory_space<vmem>>, vector<128x128xbf16>
    %cst_17 = arith.constant dense<0.000000e+00> : vector<64x128xf32>
    %26 = tpu.matmul %24, %25, %cst_17 {dimension_numbers = #tpu.dot_dimension_numbers<[1], [0], [0], [1], [0, 0, 1, 1], [], []>} : vector<64x128xbf16>, vector<128x128xbf16>, vector<64x128xf32> -> vector<64x128xf32>
    %c0_18 = arith.constant 0 : index
    %c0_19 = arith.constant 0 : index
    %27 = vector.load %arg7[%c0_18, %c0_19] : memref<1x128xf32, #tpu.memory_space<vmem>>, vector<1x128xf32>
    %28 = vector.broadcast %27 : vector<1x128xf32> to vector<64x128xf32>
    %29 = arith.addf %26, %28 : vector<64x128xf32>
    %c0_20 = arith.constant 0 : index
    %c0_21 = arith.constant 0 : index
    %30 = vector.load %arg12[%c0_20, %c0_21] : memref<64x128xf32, #tpu.memory_space<vmem>>, vector<64x128xf32>
    tpu.vector_store %arg12[%c0_20, %c0_21], %29 {strides = array<i32>} : memref<64x128xf32, #tpu.memory_space<vmem>>, vector<64x128xf32>,
    %c0_22 = arith.constant 0 : index
    %c0_23 = arith.constant 0 : index
    %31 = vector.load %arg8[%c0_22, %c0_23] : memref<128x128xbf16, #tpu.memory_space<vmem>>, vector<128x128xbf16>
    %cst_24 = arith.constant 0.000000e+00 : f32
    %32 = vector.broadcast %cst_24 : f32 to vector<8x128xf32>
    %cst_25 = arith.constant 0.000000e+00 : f32
    %33 = vector.broadcast %cst_25 : f32 to vector<8x128xf32>
    %c0_i32 = arith.constant 0 : i32
    %c8_i32 = arith.constant 8 : i32
    %34 = arith.muli %c0_i32, %c8_i32 : i32
    %35 = tpu.assume_multiple %34, 8 : i32
    %36 = arith.index_cast %35 : i32 to index
    %c0_26 = arith.constant 0 : index
    %37 = vector.load %arg12[%36, %c0_26] : memref<64x128xf32, #tpu.memory_space<vmem>>, vector<8x128xf32>
    %38 = arith.truncf %32 : vector<8x128xf32> to vector<8x128xbf16>
    %cst_27 = arith.constant dense<0.000000e+00> : vector<8x128xf32>
    %39 = tpu.matmul %38, %31, %cst_27 {dimension_numbers = #tpu.dot_dimension_numbers<[1], [0], [0], [1], [0, 0, 1, 1], [], []>} : vector<8x128xbf16>, vector<128x128xbf16>, vector<8x128xf32> -> vector<8x128xf32>
    %40 = arith.addf %37, %39 : vector<8x128xf32>
    %41 = arith.negf %40 : vector<8x128xf32>
    %42 = math.exp %41 : vector<8x128xf32>
    %cst_28 = arith.constant 1.000000e+00 : f32
    %43 = vector.broadcast %cst_28 : f32 to vector<8x128xf32>
    %44 = arith.addf %43, %42 : vector<8x128xf32>
    %45 = arith.divf %43, %44 : vector<8x128xf32>
    %46 = math.tanh %40 : vector<8x128xf32>
    %c108_i32 = arith.constant 108 : i32
    %47 = tpu.dynamic_rotate %45 by %c108_i32 dim 1 : vector<8x128xf32>, i32 -> vector<8x128xf32>
    %c88_i32 = arith.constant 88 : i32
    %48 = tpu.dynamic_rotate %46 by %c88_i32 dim 1 : vector<8x128xf32>, i32 -> vector<8x128xf32>
    %c68_i32 = arith.constant 68 : i32
    %49 = tpu.dynamic_rotate %45 by %c68_i32 dim 1 : vector<8x128xf32>, i32 -> vector<8x128xf32>
    %50 = arith.mulf %47, %33 : vector<8x128xf32>
    %51 = arith.mulf %45, %48 : vector<8x128xf32>
    %52 = arith.addf %50, %51 : vector<8x128xf32>
    %53 = math.tanh %52 : vector<8x128xf32>
    %54 = arith.mulf %49, %53 : vector<8x128xf32>
    %55 = arith.index_cast %35 : i32 to index
    %c0_29 = arith.constant 0 : index
    %56 = vector.load %arg13[%55, %c0_29] : memref<64x128xf32, #tpu.memory_space<vmem>>, vector<8x128xf32>
    tpu.vector_store %arg13[%55, %c0_29], %54 {strides = array<i32>} : memref<64x128xf32, #tpu.memory_space<vmem>>, vector<8x128xf32>,
    %c1_i32 = arith.constant 1 : i32
    %c8_i32_30 = arith.constant 8 : i32
    %57 = arith.muli %c1_i32, %c8_i32_30 : i32
    %58 = tpu.assume_multiple %57, 8 : i32
    %59 = arith.index_cast %58 : i32 to index
    %c0_31 = arith.constant 0 : index
    %60 = vector.load %arg12[%59, %c0_31] : memref<64x128xf32, #tpu.memory_space<vmem>>, vector<8x128xf32>
    %61 = arith.truncf %54 : vector<8x128xf32> to vector<8x128xbf16>
    %cst_32 = arith.constant dense<0.000000e+00> : vector<8x128xf32>
    %62 = tpu.matmul %61, %31, %cst_32 {dimension_numbers = #tpu.dot_dimension_numbers<[1], [0], [0], [1], [0, 0, 1, 1], [], []>} : vector<8x128xbf16>, vector<128x128xbf16>, vector<8x128xf32> -> vector<8x128xf32>
    %63 = arith.addf %60, %62 : vector<8x128xf32>
    %64 = arith.negf %63 : vector<8x128xf32>
    %65 = math.exp %64 : vector<8x128xf32>
    %cst_33 = arith.constant 1.000000e+00 : f32
    %66 = vector.broadcast %cst_33 : f32 to vector<8x128xf32>
    %67 = arith.addf %66, %65 : vector<8x128xf32>
    %68 = arith.divf %66, %67 : vector<8x128xf32>
    %69 = math.tanh %63 : vector<8x128xf32>
    %c108_i32_34 = arith.constant 108 : i32
    %70 = tpu.dynamic_rotate %68 by %c108_i32_34 dim 1 : vector<8x128xf32>, i32 -> vector<8x128xf32>
    %c88_i32_35 = arith.constant 88 : i32
    %71 = tpu.dynamic_rotate %69 by %c88_i32_35 dim 1 : vector<8x128xf32>, i32 -> vector<8x128xf32>
    %c68_i32_36 = arith.constant 68 : i32
    %72 = tpu.dynamic_rotate %68 by %c68_i32_36 dim 1 : vector<8x128xf32>, i32 -> vector<8x128xf32>
    %73 = arith.mulf %70, %52 : vector<8x128xf32>
    %74 = arith.mulf %68, %71 : vector<8x128xf32>
    %75 = arith.addf %73, %74 : vector<8x128xf32>
    %76 = math.tanh %75 : vector<8x128xf32>
    %77 = arith.mulf %72, %76 : vector<8x128xf32>
    %78 = arith.index_cast %58 : i32 to index
    %c0_37 = arith.constant 0 : index
    %79 = vector.load %arg13[%78, %c0_37] : memref<64x128xf32, #tpu.memory_space<vmem>>, vector<8x128xf32>
    tpu.vector_store %arg13[%78, %c0_37], %77 {strides = array<i32>} : memref<64x128xf32, #tpu.memory_space<vmem>>, vector<8x128xf32>,
    %c2_i32 = arith.constant 2 : i32
    %c8_i32_38 = arith.constant 8 : i32
    %80 = arith.muli %c2_i32, %c8_i32_38 : i32
    %81 = tpu.assume_multiple %80, 8 : i32
    %82 = arith.index_cast %81 : i32 to index
    %c0_39 = arith.constant 0 : index
    %83 = vector.load %arg12[%82, %c0_39] : memref<64x128xf32, #tpu.memory_space<vmem>>, vector<8x128xf32>
    %84 = arith.truncf %77 : vector<8x128xf32> to vector<8x128xbf16>
    %cst_40 = arith.constant dense<0.000000e+00> : vector<8x128xf32>
    %85 = tpu.matmul %84, %31, %cst_40 {dimension_numbers = #tpu.dot_dimension_numbers<[1], [0], [0], [1], [0, 0, 1, 1], [], []>} : vector<8x128xbf16>, vector<128x128xbf16>, vector<8x128xf32> -> vector<8x128xf32>
    %86 = arith.addf %83, %85 : vector<8x128xf32>
    %87 = arith.negf %86 : vector<8x128xf32>
    %88 = math.exp %87 : vector<8x128xf32>
    %cst_41 = arith.constant 1.000000e+00 : f32
    %89 = vector.broadcast %cst_41 : f32 to vector<8x128xf32>
    %90 = arith.addf %89, %88 : vector<8x128xf32>
    %91 = arith.divf %89, %90 : vector<8x128xf32>
    %92 = math.tanh %86 : vector<8x128xf32>
    %c108_i32_42 = arith.constant 108 : i32
    %93 = tpu.dynamic_rotate %91 by %c108_i32_42 dim 1 : vector<8x128xf32>, i32 -> vector<8x128xf32>
    %c88_i32_43 = arith.constant 88 : i32
    %94 = tpu.dynamic_rotate %92 by %c88_i32_43 dim 1 : vector<8x128xf32>, i32 -> vector<8x128xf32>
    %c68_i32_44 = arith.constant 68 : i32
    %95 = tpu.dynamic_rotate %91 by %c68_i32_44 dim 1 : vector<8x128xf32>, i32 -> vector<8x128xf32>
    %96 = arith.mulf %93, %75 : vector<8x128xf32>
    %97 = arith.mulf %91, %94 : vector<8x128xf32>
    %98 = arith.addf %96, %97 : vector<8x128xf32>
    %99 = math.tanh %98 : vector<8x128xf32>
    %100 = arith.mulf %95, %99 : vector<8x128xf32>
    %101 = arith.index_cast %81 : i32 to index
    %c0_45 = arith.constant 0 : index
    %102 = vector.load %arg13[%101, %c0_45] : memref<64x128xf32, #tpu.memory_space<vmem>>, vector<8x128xf32>
    tpu.vector_store %arg13[%101, %c0_45], %100 {strides = array<i32>} : memref<64x128xf32, #tpu.memory_space<vmem>>, vector<8x128xf32>,
    %c3_i32 = arith.constant 3 : i32
    %c8_i32_46 = arith.constant 8 : i32
    %103 = arith.muli %c3_i32, %c8_i32_46 : i32
    %104 = tpu.assume_multiple %103, 8 : i32
    %105 = arith.index_cast %104 : i32 to index
    %c0_47 = arith.constant 0 : index
    %106 = vector.load %arg12[%105, %c0_47] : memref<64x128xf32, #tpu.memory_space<vmem>>, vector<8x128xf32>
    %107 = arith.truncf %100 : vector<8x128xf32> to vector<8x128xbf16>
    %cst_48 = arith.constant dense<0.000000e+00> : vector<8x128xf32>
    %108 = tpu.matmul %107, %31, %cst_48 {dimension_numbers = #tpu.dot_dimension_numbers<[1], [0], [0], [1], [0, 0, 1, 1], [], []>} : vector<8x128xbf16>, vector<128x128xbf16>, vector<8x128xf32> -> vector<8x128xf32>
    %109 = arith.addf %106, %108 : vector<8x128xf32>
    %110 = arith.negf %109 : vector<8x128xf32>
    %111 = math.exp %110 : vector<8x128xf32>
    %cst_49 = arith.constant 1.000000e+00 : f32
    %112 = vector.broadcast %cst_49 : f32 to vector<8x128xf32>
    %113 = arith.addf %112, %111 : vector<8x128xf32>
    %114 = arith.divf %112, %113 : vector<8x128xf32>
    %115 = math.tanh %109 : vector<8x128xf32>
    %c108_i32_50 = arith.constant 108 : i32
    %116 = tpu.dynamic_rotate %114 by %c108_i32_50 dim 1 : vector<8x128xf32>, i32 -> vector<8x128xf32>
    %c88_i32_51 = arith.constant 88 : i32
    %117 = tpu.dynamic_rotate %115 by %c88_i32_51 dim 1 : vector<8x128xf32>, i32 -> vector<8x128xf32>
    %c68_i32_52 = arith.constant 68 : i32
    %118 = tpu.dynamic_rotate %114 by %c68_i32_52 dim 1 : vector<8x128xf32>, i32 -> vector<8x128xf32>
    %119 = arith.mulf %116, %98 : vector<8x128xf32>
    %120 = arith.mulf %114, %117 : vector<8x128xf32>
    %121 = arith.addf %119, %120 : vector<8x128xf32>
    %122 = math.tanh %121 : vector<8x128xf32>
    %123 = arith.mulf %118, %122 : vector<8x128xf32>
    %124 = arith.index_cast %104 : i32 to index
    %c0_53 = arith.constant 0 : index
    %125 = vector.load %arg13[%124, %c0_53] : memref<64x128xf32, #tpu.memory_space<vmem>>, vector<8x128xf32>
    tpu.vector_store %arg13[%124, %c0_53], %123 {strides = array<i32>} : memref<64x128xf32, #tpu.memory_space<vmem>>, vector<8x128xf32>,
    %c4_i32 = arith.constant 4 : i32
    %c8_i32_54 = arith.constant 8 : i32
    %126 = arith.muli %c4_i32, %c8_i32_54 : i32
    %127 = tpu.assume_multiple %126, 8 : i32
    %128 = arith.index_cast %127 : i32 to index
    %c0_55 = arith.constant 0 : index
    %129 = vector.load %arg12[%128, %c0_55] : memref<64x128xf32, #tpu.memory_space<vmem>>, vector<8x128xf32>
    %130 = arith.truncf %123 : vector<8x128xf32> to vector<8x128xbf16>
    %cst_56 = arith.constant dense<0.000000e+00> : vector<8x128xf32>
    %131 = tpu.matmul %130, %31, %cst_56 {dimension_numbers = #tpu.dot_dimension_numbers<[1], [0], [0], [1], [0, 0, 1, 1], [], []>} : vector<8x128xbf16>, vector<128x128xbf16>, vector<8x128xf32> -> vector<8x128xf32>
    %132 = arith.addf %129, %131 : vector<8x128xf32>
    %133 = arith.negf %132 : vector<8x128xf32>
    %134 = math.exp %133 : vector<8x128xf32>
    %cst_57 = arith.constant 1.000000e+00 : f32
    %135 = vector.broadcast %cst_57 : f32 to vector<8x128xf32>
    %136 = arith.addf %135, %134 : vector<8x128xf32>
    %137 = arith.divf %135, %136 : vector<8x128xf32>
    %138 = math.tanh %132 : vector<8x128xf32>
    %c108_i32_58 = arith.constant 108 : i32
    %139 = tpu.dynamic_rotate %137 by %c108_i32_58 dim 1 : vector<8x128xf32>, i32 -> vector<8x128xf32>
    %c88_i32_59 = arith.constant 88 : i32
    %140 = tpu.dynamic_rotate %138 by %c88_i32_59 dim 1 : vector<8x128xf32>, i32 -> vector<8x128xf32>
    %c68_i32_60 = arith.constant 68 : i32
    %141 = tpu.dynamic_rotate %137 by %c68_i32_60 dim 1 : vector<8x128xf32>, i32 -> vector<8x128xf32>
    %142 = arith.mulf %139, %121 : vector<8x128xf32>
    %143 = arith.mulf %137, %140 : vector<8x128xf32>
    %144 = arith.addf %142, %143 : vector<8x128xf32>
    %145 = math.tanh %144 : vector<8x128xf32>
    %146 = arith.mulf %141, %145 : vector<8x128xf32>
    %147 = arith.index_cast %127 : i32 to index
    %c0_61 = arith.constant 0 : index
    %148 = vector.load %arg13[%147, %c0_61] : memref<64x128xf32, #tpu.memory_space<vmem>>, vector<8x128xf32>
    tpu.vector_store %arg13[%147, %c0_61], %146 {strides = array<i32>} : memref<64x128xf32, #tpu.memory_space<vmem>>, vector<8x128xf32>,
    %c5_i32 = arith.constant 5 : i32
    %c8_i32_62 = arith.constant 8 : i32
    %149 = arith.muli %c5_i32, %c8_i32_62 : i32
    %150 = tpu.assume_multiple %149, 8 : i32
    %151 = arith.index_cast %150 : i32 to index
    %c0_63 = arith.constant 0 : index
    %152 = vector.load %arg12[%151, %c0_63] : memref<64x128xf32, #tpu.memory_space<vmem>>, vector<8x128xf32>
    %153 = arith.truncf %146 : vector<8x128xf32> to vector<8x128xbf16>
    %cst_64 = arith.constant dense<0.000000e+00> : vector<8x128xf32>
    %154 = tpu.matmul %153, %31, %cst_64 {dimension_numbers = #tpu.dot_dimension_numbers<[1], [0], [0], [1], [0, 0, 1, 1], [], []>} : vector<8x128xbf16>, vector<128x128xbf16>, vector<8x128xf32> -> vector<8x128xf32>
    %155 = arith.addf %152, %154 : vector<8x128xf32>
    %156 = arith.negf %155 : vector<8x128xf32>
    %157 = math.exp %156 : vector<8x128xf32>
    %cst_65 = arith.constant 1.000000e+00 : f32
    %158 = vector.broadcast %cst_65 : f32 to vector<8x128xf32>
    %159 = arith.addf %158, %157 : vector<8x128xf32>
    %160 = arith.divf %158, %159 : vector<8x128xf32>
    %161 = math.tanh %155 : vector<8x128xf32>
    %c108_i32_66 = arith.constant 108 : i32
    %162 = tpu.dynamic_rotate %160 by %c108_i32_66 dim 1 : vector<8x128xf32>, i32 -> vector<8x128xf32>
    %c88_i32_67 = arith.constant 88 : i32
    %163 = tpu.dynamic_rotate %161 by %c88_i32_67 dim 1 : vector<8x128xf32>, i32 -> vector<8x128xf32>
    %c68_i32_68 = arith.constant 68 : i32
    %164 = tpu.dynamic_rotate %160 by %c68_i32_68 dim 1 : vector<8x128xf32>, i32 -> vector<8x128xf32>
    %165 = arith.mulf %162, %144 : vector<8x128xf32>
    %166 = arith.mulf %160, %163 : vector<8x128xf32>
    %167 = arith.addf %165, %166 : vector<8x128xf32>
    %168 = math.tanh %167 : vector<8x128xf32>
    %169 = arith.mulf %164, %168 : vector<8x128xf32>
    %170 = arith.index_cast %150 : i32 to index
    %c0_69 = arith.constant 0 : index
    %171 = vector.load %arg13[%170, %c0_69] : memref<64x128xf32, #tpu.memory_space<vmem>>, vector<8x128xf32>
    tpu.vector_store %arg13[%170, %c0_69], %169 {strides = array<i32>} : memref<64x128xf32, #tpu.memory_space<vmem>>, vector<8x128xf32>,
    %c6_i32 = arith.constant 6 : i32
    %c8_i32_70 = arith.constant 8 : i32
    %172 = arith.muli %c6_i32, %c8_i32_70 : i32
    %173 = tpu.assume_multiple %172, 8 : i32
    %174 = arith.index_cast %173 : i32 to index
    %c0_71 = arith.constant 0 : index
    %175 = vector.load %arg12[%174, %c0_71] : memref<64x128xf32, #tpu.memory_space<vmem>>, vector<8x128xf32>
    %176 = arith.truncf %169 : vector<8x128xf32> to vector<8x128xbf16>
    %cst_72 = arith.constant dense<0.000000e+00> : vector<8x128xf32>
    %177 = tpu.matmul %176, %31, %cst_72 {dimension_numbers = #tpu.dot_dimension_numbers<[1], [0], [0], [1], [0, 0, 1, 1], [], []>} : vector<8x128xbf16>, vector<128x128xbf16>, vector<8x128xf32> -> vector<8x128xf32>
    %178 = arith.addf %175, %177 : vector<8x128xf32>
    %179 = arith.negf %178 : vector<8x128xf32>
    %180 = math.exp %179 : vector<8x128xf32>
    %cst_73 = arith.constant 1.000000e+00 : f32
    %181 = vector.broadcast %cst_73 : f32 to vector<8x128xf32>
    %182 = arith.addf %181, %180 : vector<8x128xf32>
    %183 = arith.divf %181, %182 : vector<8x128xf32>
    %184 = math.tanh %178 : vector<8x128xf32>
    %c108_i32_74 = arith.constant 108 : i32
    %185 = tpu.dynamic_rotate %183 by %c108_i32_74 dim 1 : vector<8x128xf32>, i32 -> vector<8x128xf32>
    %c88_i32_75 = arith.constant 88 : i32
    %186 = tpu.dynamic_rotate %184 by %c88_i32_75 dim 1 : vector<8x128xf32>, i32 -> vector<8x128xf32>
    %c68_i32_76 = arith.constant 68 : i32
    %187 = tpu.dynamic_rotate %183 by %c68_i32_76 dim 1 : vector<8x128xf32>, i32 -> vector<8x128xf32>
    %188 = arith.mulf %185, %167 : vector<8x128xf32>
    %189 = arith.mulf %183, %186 : vector<8x128xf32>
    %190 = arith.addf %188, %189 : vector<8x128xf32>
    %191 = math.tanh %190 : vector<8x128xf32>
    %192 = arith.mulf %187, %191 : vector<8x128xf32>
    %193 = arith.index_cast %173 : i32 to index
    %c0_77 = arith.constant 0 : index
    %194 = vector.load %arg13[%193, %c0_77] : memref<64x128xf32, #tpu.memory_space<vmem>>, vector<8x128xf32>
    tpu.vector_store %arg13[%193, %c0_77], %192 {strides = array<i32>} : memref<64x128xf32, #tpu.memory_space<vmem>>, vector<8x128xf32>,
    %c7_i32 = arith.constant 7 : i32
    %c8_i32_78 = arith.constant 8 : i32
    %195 = arith.muli %c7_i32, %c8_i32_78 : i32
    %196 = tpu.assume_multiple %195, 8 : i32
    %197 = arith.index_cast %196 : i32 to index
    %c0_79 = arith.constant 0 : index
    %198 = vector.load %arg12[%197, %c0_79] : memref<64x128xf32, #tpu.memory_space<vmem>>, vector<8x128xf32>
    %199 = arith.truncf %192 : vector<8x128xf32> to vector<8x128xbf16>
    %cst_80 = arith.constant dense<0.000000e+00> : vector<8x128xf32>
    %200 = tpu.matmul %199, %31, %cst_80 {dimension_numbers = #tpu.dot_dimension_numbers<[1], [0], [0], [1], [0, 0, 1, 1], [], []>} : vector<8x128xbf16>, vector<128x128xbf16>, vector<8x128xf32> -> vector<8x128xf32>
    %201 = arith.addf %198, %200 : vector<8x128xf32>
    %202 = arith.negf %201 : vector<8x128xf32>
    %203 = math.exp %202 : vector<8x128xf32>
    %cst_81 = arith.constant 1.000000e+00 : f32
    %204 = vector.broadcast %cst_81 : f32 to vector<8x128xf32>
    %205 = arith.addf %204, %203 : vector<8x128xf32>
    %206 = arith.divf %204, %205 : vector<8x128xf32>
    %207 = math.tanh %201 : vector<8x128xf32>
    %c108_i32_82 = arith.constant 108 : i32
    %208 = tpu.dynamic_rotate %206 by %c108_i32_82 dim 1 : vector<8x128xf32>, i32 -> vector<8x128xf32>
    %c88_i32_83 = arith.constant 88 : i32
    %209 = tpu.dynamic_rotate %207 by %c88_i32_83 dim 1 : vector<8x128xf32>, i32 -> vector<8x128xf32>
    %c68_i32_84 = arith.constant 68 : i32
    %210 = tpu.dynamic_rotate %206 by %c68_i32_84 dim 1 : vector<8x128xf32>, i32 -> vector<8x128xf32>
    %211 = arith.mulf %208, %190 : vector<8x128xf32>
    %212 = arith.mulf %206, %209 : vector<8x128xf32>
    %213 = arith.addf %211, %212 : vector<8x128xf32>
    %214 = math.tanh %213 : vector<8x128xf32>
    %215 = arith.mulf %210, %214 : vector<8x128xf32>
    %216 = arith.index_cast %196 : i32 to index
    %c0_85 = arith.constant 0 : index
    %217 = vector.load %arg13[%216, %c0_85] : memref<64x128xf32, #tpu.memory_space<vmem>>, vector<8x128xf32>
    tpu.vector_store %arg13[%216, %c0_85], %215 {strides = array<i32>} : memref<64x128xf32, #tpu.memory_space<vmem>>, vector<8x128xf32>,
    %c8_i32_86 = arith.constant 8 : i32
    %c0_87 = arith.constant 0 : index
    %c0_88 = arith.constant 0 : index
    %218 = vector.load %arg13[%c0_87, %c0_88] : memref<64x128xf32, #tpu.memory_space<vmem>>, vector<64x128xf32>
    %219 = arith.truncf %218 : vector<64x128xf32> to vector<64x128xbf16>
    %c0_89 = arith.constant 0 : index
    %c0_90 = arith.constant 0 : index
    %220 = vector.load %arg9[%c0_89, %c0_90] : memref<128x128xbf16, #tpu.memory_space<vmem>>, vector<128x128xbf16>
    %cst_91 = arith.constant dense<0.000000e+00> : vector<64x128xf32>
    %221 = tpu.matmul %219, %220, %cst_91 {dimension_numbers = #tpu.dot_dimension_numbers<[1], [0], [0], [1], [0, 0, 1, 1], [], []>} : vector<64x128xbf16>, vector<128x128xbf16>, vector<64x128xf32> -> vector<64x128xf32>
    %c0_92 = arith.constant 0 : index
    %c0_93 = arith.constant 0 : index
    %222 = vector.load %arg10[%c0_92, %c0_93] : memref<1x128xf32, #tpu.memory_space<vmem>>, vector<1x128xf32>
    %223 = vector.broadcast %222 : vector<1x128xf32> to vector<64x128xf32>
    %224 = arith.addf %221, %223 : vector<64x128xf32>
    %225 = vector.shape_cast %224 : vector<64x128xf32> to vector<8x8x128xf32>
    %c0_94 = arith.constant 0 : index
    %c0_95 = arith.constant 0 : index
    %c0_96 = arith.constant 0 : index
    %226 = vector.load %arg11[%c0_94, %c0_95, %c0_96] : memref<8x8x128xf32, #tpu.memory_space<vmem>>, vector<8x8x128xf32>
    tpu.vector_store %arg11[%c0_94, %c0_95, %c0_96], %225 {strides = array<i32>} : memref<8x8x128xf32, #tpu.memory_space<vmem>>, vector<8x8x128xf32>,
    return
  }
  func.func @transform_0(%arg0: i32) -> (i32, i32, i32) {
    %c0_i32 = arith.constant 0 : i32
    %c0_i32_0 = arith.constant 0 : i32
    %c0_i32_1 = arith.constant 0 : i32
    return %c0_i32, %arg0, %c0_i32_0 : i32, i32, i32
  }
  func.func @transform_1(%arg0: i32) -> (i32, i32) {
    %c0_i32 = arith.constant 0 : i32
    %c0_i32_0 = arith.constant 0 : i32
    %c0_i32_1 = arith.constant 0 : i32
    return %c0_i32, %c0_i32_0 : i32, i32
  }
  func.func @transform_2(%arg0: i32) -> (i32, i32) {
    %c0_i32 = arith.constant 0 : i32
    %c0_i32_0 = arith.constant 0 : i32
    %c0_i32_1 = arith.constant 0 : i32
    return %c0_i32, %c0_i32_0 : i32, i32
  }
  func.func @transform_3(%arg0: i32) -> (i32, i32) {
    %c0_i32 = arith.constant 0 : i32
    %c0_i32_0 = arith.constant 0 : i32
    %c0_i32_1 = arith.constant 0 : i32
    return %c0_i32, %c0_i32_0 : i32, i32
  }
  func.func @transform_4(%arg0: i32) -> (i32, i32) {
    %c0_i32 = arith.constant 0 : i32
    %c0_i32_0 = arith.constant 0 : i32
    %c0_i32_1 = arith.constant 0 : i32
    return %c0_i32, %c0_i32_0 : i32, i32
  }
  func.func @transform_5(%arg0: i32) -> (i32, i32) {
    %c0_i32 = arith.constant 0 : i32
    %c0_i32_0 = arith.constant 0 : i32
    %c0_i32_1 = arith.constant 0 : i32
    return %c0_i32, %c0_i32_0 : i32, i32
  }
  func.func @transform_6(%arg0: i32) -> (i32, i32) {
    %c0_i32 = arith.constant 0 : i32
    %c0_i32_0 = arith.constant 0 : i32
    %c0_i32_1 = arith.constant 0 : i32
    return %c0_i32, %c0_i32_0 : i32, i32
  }
  func.func @transform_7(%arg0: i32) -> (i32, i32) {
    %c0_i32 = arith.constant 0 : i32
    %c0_i32_0 = arith.constant 0 : i32
    %c0_i32_1 = arith.constant 0 : i32
    return %c0_i32, %c0_i32_0 : i32, i32
  }
  func.func @transform_8(%arg0: i32) -> (i32, i32) {
    %c0_i32 = arith.constant 0 : i32
    %c0_i32_0 = arith.constant 0 : i32
    %c0_i32_1 = arith.constant 0 : i32
    return %c0_i32, %c0_i32_0 : i32, i32
  }
  func.func @transform_9(%arg0: i32) -> (i32, i32) {
    %c0_i32 = arith.constant 0 : i32
    %c0_i32_0 = arith.constant 0 : i32
    %c0_i32_1 = arith.constant 0 : i32
    return %c0_i32, %c0_i32_0 : i32, i32
  }
  func.func @transform_10(%arg0: i32) -> (i32, i32, i32) {
    %c0_i32 = arith.constant 0 : i32
    %c0_i32_0 = arith.constant 0 : i32
    %c0_i32_1 = arith.constant 0 : i32
    return %c0_i32, %arg0, %c0_i32_0 : i32, i32, i32
  }
}

</mosaic_0001>

<llo_original>
// kernel: tpu_custom_call.1
$region0: #{tpu_custom_call.1}
  #allocation0 [shape = 'u32[]', space=smem, size = 0x4, offset = 0x4, fixed_abs, tag = 'smem constant byte address 0x4 - core index']
  #allocation1 [shape = 'u32[144,128]{1,0:T(1,128)}', space=vmem, size = 0x12000, scoped, tag = 'internal scratch']
  #allocation2 [shape = 'f32[64,128]{1,0:T(8,128)}', space=vmem, size = 0x8000, scoped, tag = 'scratch operand']
  #allocation3 [shape = 'f32[64,128]{1,0:T(8,128)}', space=vmem, size = 0x8000, scoped, tag = 'scratch operand']
  %s0 = inlined_call_operand.hbm [shape: f32[8,8,8], index: 0, kind: input, shape index: {}]
  %s1 = inlined_call_operand.hbm [shape: bf16[8,256], index: 1, kind: input, shape index: {}]
  %s2 = inlined_call_operand.vmem [shape: f32[1,256], index: 2, kind: input, shape index: {}]
  %s3 = inlined_call_operand.hbm [shape: bf16[256,128], index: 3, kind: input, shape index: {}]
  %s4 = inlined_call_operand.vmem [shape: f32[1,128], index: 4, kind: input, shape index: {}]
  %s5 = inlined_call_operand.hbm [shape: bf16[128,128], index: 5, kind: input, shape index: {}]
  %s6 = inlined_call_operand.vmem [shape: f32[1,128], index: 6, kind: input, shape index: {}]
  %s7 = inlined_call_operand.hbm [shape: bf16[128,128], index: 7, kind: input, shape index: {}]
  %s8 = inlined_call_operand.hbm [shape: bf16[128,128], index: 8, kind: input, shape index: {}]
  %s9 = inlined_call_operand.vmem [shape: f32[1,128], index: 9, kind: input, shape index: {}]
  %s10 = inlined_call_operand.hbm [shape: f32[8,8,128], index: 10, kind: output, shape index: {}]
  %s11 = sld [smem:[#allocation0]]
  $region74: #{tpu_custom_call.1} parent=0
    _
  %s13 = ssub.s32 1, %s11
  %s14 = scalar_select 0, %s13, %s11
  $region1: #{tpu_custom_call.1} parent=0
    #allocation4 [shape = 'u8[32768]{0}', space=vmem, size = 0x8000, scoped, tag = 'input window, operand 0, single buffered']
    #allocation5 [shape = 's32[1]{0}', space=sflag, size = 0x4, scoped, tag = 'scoped memory for tpu_custom_call.1']
    #allocation6 [shape = 's32[1]{0}', space=sflag, size = 0x4, scoped, tag = 'scoped memory for tpu_custom_call.1']
    #allocation7 [shape = 'u8[4096]{0}', space=vmem, size = 0x1000, scoped, tag = 'input window, operand 1, single buffered']
    #allocation8 [shape = 's32[1]{0}', space=sflag, size = 0x4, scoped, tag = 'scoped memory for tpu_custom_call.1']
    #allocation9 [shape = 'u8[65536]{0}', space=vmem, size = 0x10000, scoped, tag = 'input window, operand 3, single buffered']
    #allocation10 [shape = 'u8[32768]{0}', space=vmem, size = 0x8000, scoped, tag = 'input window, operand 5, single buffered']
    #allocation11 [shape = 's32[1]{0}', space=sflag, size = 0x4, scoped, tag = 'scoped memory for tpu_custom_call.1']
    #allocation12 [shape = 'u8[32768]{0}', space=vmem, size = 0x8000, scoped, tag = 'input window, operand 7, single buffered']
    #allocation13 [shape = 'u8[32768]{0}', space=vmem, size = 0x8000, scoped, tag = 'input window, operand 8, single buffered']
    #allocation14 [shape = 's32[1]{0}', space=sflag, size = 0x4, scoped, tag = 'scoped memory for tpu_custom_call.1']
    #allocation15 [shape = 'u8[32768]{0}', space=vmem, size = 0x8000, scoped, tag = 'output window, operand 0, single buffered']
    %15 = vsyncpa [#allocation5], 0
    %16 = vsyncpa [#allocation8], 0
    %17 = vsyncpa [#allocation11], 0
    %18 = vsyncpa [#allocation14], 0
    %19 = vsyncpa [#allocation6], 0
    // Predicated region
    $region2: #{tpu_custom_call.1} parent=1 // pred_check
      _
    $region3: #{tpu_custom_call.1} parent=1 // pred_check_branch
      %21 = sbr.rel (0) target = $region5
    $region4: #{tpu_custom_call.1} parent=1 // pred_region
      %s23 = ssub.s32 1024, 1024
      %24 = vsyncadd [#allocation5], %s23
      %s25 = sshll.u32 [#allocation4], 4
      %s26 = int_to_ptr.vmem [resolvable:$true] %s25
      %31 = dma.hbm_to_vmem [thread:$0]  %s0, 1024, %s26, [#allocation5], 128, 128, 8
    $region5: #{tpu_custom_call.1} parent=1 // pred_fallthru
      _
    // Predicated region
    $region6: #{tpu_custom_call.1} parent=1 // pred_check
      _
    $region7: #{tpu_custom_call.1} parent=1 // pred_check_branch
      %33 = sbr.rel (0) target = $region9
    $region8: #{tpu_custom_call.1} parent=1 // pred_region
      %s35 = ssub.s32 128, 128
      %36 = vsyncadd [#allocation8], %s35
      %s38 = sshll.u32 [#allocation7], 4
      %s39 = int_to_ptr.vmem [resolvable:$true] %s38
      %41 = dma.hbm_to_vmem [thread:$0]  %s1, 128, %s39, [#allocation8]
    $region9: #{tpu_custom_call.1} parent=1 // pred_fallthru
      _
    // Predicated region
    $region10: #{tpu_custom_call.1} parent=1 // pred_check
      _
    $region11: #{tpu_custom_call.1} parent=1 // pred_check_branch
      %43 = sbr.rel (0) target = $region13
    $region12: #{tpu_custom_call.1} parent=1 // pred_region
      _
    $region13: #{tpu_custom_call.1} parent=1 // pred_fallthru
      _
    // Predicated region
    $region14: #{tpu_custom_call.1} parent=1 // pred_check
      _
    $region15: #{tpu_custom_call.1} parent=1 // pred_check_branch
      %45 = sbr.rel (0) target = $region17
    $region16: #{tpu_custom_call.1} parent=1 // pred_region
      %s47 = ssub.s32 2048, 2048
      %48 = vsyncadd [#allocation8], %s47
      %s49 = sshll.u32 [#allocation9], 4
      %s50 = int_to_ptr.vmem [resolvable:$true] %s49
      %55 = dma.hbm_to_vmem [thread:$0]  %s3, 2048, %s50, [#allocation8], 64, 64, 4
    $region17: #{tpu_custom_call.1} parent=1 // pred_fallthru
      _
    // Predicated region
    $region18: #{tpu_custom_call.1} parent=1 // pred_check
      _
    $region19: #{tpu_custom_call.1} parent=1 // pred_check_branch
      %57 = sbr.rel (0) target = $region21
    $region20: #{tpu_custom_call.1} parent=1 // pred_region
      _
    $region21: #{tpu_custom_call.1} parent=1 // pred_fallthru
      _
    // Predicated region
    $region22: #{tpu_custom_call.1} parent=1 // pred_check
      _
    $region23: #{tpu_custom_call.1} parent=1 // pred_check_branch
      %59 = sbr.rel (0) target = $region25
    $region24: #{tpu_custom_call.1} parent=1 // pred_region
      %s61 = ssub.s32 1024, 1024
      %62 = vsyncadd [#allocation11], %s61
      %s63 = sshll.u32 [#allocation10], 4
      %s64 = int_to_ptr.vmem [resolvable:$true] %s63
      %69 = dma.hbm_to_vmem [thread:$0]  %s5, 1024, %s64, [#allocation11], 64, 64, 4
    $region25: #{tpu_custom_call.1} parent=1 // pred_fallthru
      _
    // Predicated region
    $region26: #{tpu_custom_call.1} parent=1 // pred_check
      _
    $region27: #{tpu_custom_call.1} parent=1 // pred_check_branch
      %71 = sbr.rel (0) target = $region29
    $region28: #{tpu_custom_call.1} parent=1 // pred_region
      _
    $region29: #{tpu_custom_call.1} parent=1 // pred_fallthru
      _
    // Predicated region
    $region30: #{tpu_custom_call.1} parent=1 // pred_check
      _
    $region31: #{tpu_custom_call.1} parent=1 // pred_check_branch
      %73 = sbr.rel (0) target = $region33
    $region32: #{tpu_custom_call.1} parent=1 // pred_region
      %s75 = ssub.s32 1024, 1024
      %76 = vsyncadd [#allocation11], %s75
      %s77 = sshll.u32 [#allocation12], 4
      %s78 = int_to_ptr.vmem [resolvable:$true] %s77
      %83 = dma.hbm_to_vmem [thread:$0]  %s7, 1024, %s78, [#allocation11], 64, 64, 4
    $region33: #{tpu_custom_call.1} parent=1 // pred_fallthru
      _
    // Predicated region
    $region34: #{tpu_custom_call.1} parent=1 // pred_check
      _
    $region35: #{tpu_custom_call.1} parent=1 // pred_check_branch
      %85 = sbr.rel (0) target = $region37
    $region36: #{tpu_custom_call.1} parent=1 // pred_region
      %s87 = ssub.s32 1024, 1024
      %88 = vsyncadd [#allocation14], %s87
      %s89 = sshll.u32 [#allocation13], 4
      %s90 = int_to_ptr.vmem [resolvable:$true] %s89
      %95 = dma.hbm_to_vmem [thread:$0]  %s8, 1024, %s90, [#allocation14], 64, 64, 4
    $region37: #{tpu_custom_call.1} parent=1 // pred_fallthru
      _
    // Predicated region
    $region38: #{tpu_custom_call.1} parent=1 // pred_check
      _
    $region39: #{tpu_custom_call.1} parent=1 // pred_check_branch
      %97 = sbr.rel (0) target = $region41
    $region40: #{tpu_custom_call.1} parent=1 // pred_region
      _
    $region41: #{tpu_custom_call.1} parent=1 // pred_fallthru
      _
    // Predicated region
    $region42: #{tpu_custom_call.1} parent=1 // pred_check
      _
    $region43: #{tpu_custom_call.1} parent=1 // pred_check_branch
      %99 = sbr.rel (0) target = $region45
    $region44: #{tpu_custom_call.1} parent=1 // pred_region
      %100 = dma.done [#allocation5], 1024
    $region45: #{tpu_custom_call.1} parent=1 // pred_fallthru
      _
    // Predicated region
    $region46: #{tpu_custom_call.1} parent=1 // pred_check
      _
    $region47: #{tpu_custom_call.1} parent=1 // pred_check_branch
      %102 = sbr.rel (0) target = $region49
    $region48: #{tpu_custom_call.1} parent=1 // pred_region
      %103 = dma.done [#allocation8], 128
    $region49: #{tpu_custom_call.1} parent=1 // pred_fallthru
      _
    // Predicated region
    $region50: #{tpu_custom_call.1} parent=1 // pred_check
      _
    $region51: #{tpu_custom_call.1} parent=1 // pred_check_branch
      %105 = sbr.rel (0) target = $region53
    $region52: #{tpu_custom_call.1} parent=1 // pred_region
      %106 = dma.done [#allocation8], 2048
    $region53: #{tpu_custom_call.1} parent=1 // pred_fallthru
      _
    // Predicated region
    $region54: #{tpu_custom_call.1} parent=1 // pred_check
      _
    $region55: #{tpu_custom_call.1} parent=1 // pred_check_branch
      %108 = sbr.rel (0) target = $region57
    $region56: #{tpu_custom_call.1} parent=1 // pred_region
      %109 = dma.done [#allocation11], 1024
    $region57: #{tpu_custom_call.1} parent=1 // pred_fallthru
      _
    // Predicated region
    $region58: #{tpu_custom_call.1} parent=1 // pred_check
      _
    $region59: #{tpu_custom_call.1} parent=1 // pred_check_branch
      %111 = sbr.rel (0) target = $region61
    $region60: #{tpu_custom_call.1} parent=1 // pred_region
      %112 = dma.done [#allocation11], 1024
    $region61: #{tpu_custom_call.1} parent=1 // pred_fallthru
      _
    // Predicated region
    $region62: #{tpu_custom_call.1} parent=1 // pred_check
      _
    $region63: #{tpu_custom_call.1} parent=1 // pred_check_branch
      %114 = sbr.rel (0) target = $region65
    $region64: #{tpu_custom_call.1} parent=1 // pred_region
      %115 = dma.done [#allocation14], 1024
    $region65: #{tpu_custom_call.1} parent=1 // pred_fallthru
      _
    %v117 = vld [vmem:[#allocation4] sm:$0xff]
    %v118 = vld [vmem:[#allocation4 + $0x8] sm:$0xff]
    %v119 = vld [vmem:[#allocation4 + $0x10] sm:$0xff]
    %v120 = vld [vmem:[#allocation4 + $0x18] sm:$0xff]
    %v121 = vld [vmem:[#allocation4 + $0x20] sm:$0xff]
    %v122 = vld [vmem:[#allocation4 + $0x28] sm:$0xff]
    %v123 = vld [vmem:[#allocation4 + $0x30] sm:$0xff]
    %v124 = vld [vmem:[#allocation4 + $0x38] sm:$0xff]
    %v125 = vpack.c.bf16 %v118, %v117
    %v126 = vpack.c.bf16 %v120, %v119
    %v127 = vpack.c.bf16 %v122, %v121
    %v128 = vpack.c.bf16 %v124, %v123
    %v129 = vld [vmem:[#allocation7] sm:$0xff]
    %v130 = vld [vmem:[%s2] sm:$0x3]
    %v132 = vlaneseq
    %v133 = vshrl.u32 %v132, 7
    %v134 = vsub.s32 0, %v133
    %v135 = vrot.slane %v130, %v134
    %v136 = vlaneseq
    %v137 = vshrl.u32 %v136, 7
    %v138 = vsub.s32 1, %v137
    %v139 = vrot.slane %v130, %v138
    %v143 = vunpack.c.l.b16 %v129
    %v144 = vunpack.c.h.b16 %v129
    %v145 = vpack.c.b16 %v143, %v143
    %v146 = vpack.c.b16 %v144, %v144
    %vm147 = vcmask 64512
    %v149 = vsel %vm147, %v125, 0
    %v152 = vsel %vm147, %v126, 0
    %v155 = vsel %vm147, %v127, 0
    %v158 = vsel %vm147, %v128, 0
    %vm160 = vcmask 1043456
    %v162 = vsel %vm160, %v145, 0
    %v165 = vsel %vm160, %v146, 0
    %167 = vmatprep.subr.bf16.mxu0 %v165
    %168 = vmatpush1.bf16.msra.mxu0 %v162
    %169 = vmatprep.subr.bf16.mxu0 0
    %170 = vmatpush1.bf16.msra.mxu0 0
    %171 = vmatprep.subr.bf16.mxu0 0
    %172 = vmatpush1.bf16.msra.mxu0 0
    %173 = vmatprep.subr.bf16.mxu0 0
    %174 = vmatpush1.bf16.msra.mxu0 0
    %175 = vmatprep.subr.bf16.mxu0 0
    %176 = vmatpush1.bf16.msra.mxu0 0
    %177 = vmatprep.subr.bf16.mxu0 0
    %178 = vmatpush1.bf16.msra.mxu0 0
    %179 = vmatprep.subr.bf16.mxu0 0
    %180 = vmatpush1.bf16.msra.mxu0 0
    %181 = vmatprep.subr.bf16.mxu0 0
    %182 = vmatpush1.bf16.msra.mxu0 0
    %183 = vmatprep.subr.bf16.mxu0 0
    %184 = vmatpush1.bf16.msra.mxu0 0
    %185 = vmatprep.subr.bf16.mxu0 0
    %186 = vmatpush1.bf16.msra.mxu0 0
    %187 = vmatprep.subr.bf16.mxu0 0
    %188 = vmatpush1.bf16.msra.mxu0 0
    %189 = vmatprep.subr.bf16.mxu0 0
    %190 = vmatpush1.bf16.msra.mxu0 0
    %191 = vmatprep.subr.bf16.mxu0 0
    %192 = vmatpush1.bf16.msra.mxu0 0
    %193 = vmatprep.subr.bf16.mxu0 0
    %194 = vmatpush1.bf16.msra.mxu0 0
    %195 = vmatprep.subr.bf16.mxu0 0
    %196 = vmatpush1.bf16.msra.mxu0 0
    %197 = vmatprep.subr.bf16.mxu0 0
    %198 = vmatpush1.bf16.msra.mxu0 0
    %199 = vmatprep.mubr.bf16.mxu0 0
    %200 = vmatmul.mubr.bf16.gmra.mrb[0].mxu0 %v149
    %v201 = vpop.f32.mrb[0].mxu0
    %v202 = vadd.f32 %v135, %v201
    %v203 = vpop.f32.mrb[0].mxu0
    %v204 = vadd.f32 %v139, %v203
    %v205 = vpop.f32.mrb[0].mxu0
    %v206 = vadd.f32 %v135, %v205
    %v207 = vpop.f32.mrb[0].mxu0
    %v208 = vadd.f32 %v139, %v207
    %209 = vmatprep.mubr.bf16.mxu0 0
    %210 = vmatmul.mubr.bf16.gmra.mrb[0].mxu0 %v152
    %v211 = vpop.f32.mrb[0].mxu0
    %v212 = vadd.f32 %v135, %v211
    %v213 = vpop.f32.mrb[0].mxu0
    %v214 = vadd.f32 %v139, %v213
    %v215 = vpop.f32.mrb[0].mxu0
    %v216 = vadd.f32 %v135, %v215
    %v217 = vpop.f32.mrb[0].mxu0
    %v218 = vadd.f32 %v139, %v217
    %219 = vmatprep.mubr.bf16.mxu0 0
    %220 = vmatmul.mubr.bf16.gmra.mrb[0].mxu0 %v155
    %v221 = vpop.f32.mrb[0].mxu0
    %v222 = vadd.f32 %v135, %v221
    %v223 = vpop.f32.mrb[0].mxu0
    %v224 = vadd.f32 %v139, %v223
    %v225 = vpop.f32.mrb[0].mxu0
    %v226 = vadd.f32 %v135, %v225
    %v227 = vpop.f32.mrb[0].mxu0
    %v228 = vadd.f32 %v139, %v227
    %229 = vmatprep.mubr.bf16.mxu0 0
    %230 = vmatmul.mubr.bf16.gmra.mrb[0].mxu0 %v158
    %v231 = vpop.f32.mrb[0].mxu0
    %v232 = vadd.f32 %v135, %v231
    %v233 = vpop.f32.mrb[0].mxu0
    %v234 = vadd.f32 %v139, %v233
    %v235 = vpop.f32.mrb[0].mxu0
    %v236 = vadd.f32 %v135, %v235
    %v237 = vpop.f32.mrb[0].mxu0
    %v238 = vadd.f32 %v139, %v237
    %239 = vdwg.mxu0
    %vm240 = vcmp.ge.f32.partialorder %v202, 0.0
    %vm241 = vcmp.ge.f32.partialorder %v204, 0.0
    %vm242 = vcmp.ge.f32.partialorder %v206, 0.0
    %vm243 = vcmp.ge.f32.partialorder %v208, 0.0
    %vm244 = vcmp.ge.f32.partialorder %v212, 0.0
    %vm245 = vcmp.ge.f32.partialorder %v214, 0.0
    %vm246 = vcmp.ge.f32.partialorder %v216, 0.0
    %vm247 = vcmp.ge.f32.partialorder %v218, 0.0
    %vm248 = vcmp.ge.f32.partialorder %v222, 0.0
    %vm249 = vcmp.ge.f32.partialorder %v224, 0.0
    %vm250 = vcmp.ge.f32.partialorder %v226, 0.0
    %vm251 = vcmp.ge.f32.partialorder %v228, 0.0
    %vm252 = vcmp.ge.f32.partialorder %v232, 0.0
    %vm253 = vcmp.ge.f32.partialorder %v234, 0.0
    %vm254 = vcmp.ge.f32.partialorder %v236, 0.0
    %vm255 = vcmp.ge.f32.partialorder %v238, 0.0
    %v256 = vmul.f32 %v202, 0.01
    %v257 = vmul.f32 %v204, 0.01
    %v258 = vmul.f32 %v206, 0.01
    %v259 = vmul.f32 %v208, 0.01
    %v260 = vmul.f32 %v212, 0.01
    %v261 = vmul.f32 %v214, 0.01
    %v262 = vmul.f32 %v216, 0.01
    %v263 = vmul.f32 %v218, 0.01
    %v264 = vmul.f32 %v222, 0.01
    %v265 = vmul.f32 %v224, 0.01
    %v266 = vmul.f32 %v226, 0.01
    %v267 = vmul.f32 %v228, 0.01
    %v268 = vmul.f32 %v232, 0.01
    %v269 = vmul.f32 %v234, 0.01
    %v270 = vmul.f32 %v236, 0.01
    %v271 = vmul.f32 %v238, 0.01
    %v272 = vsel %vm240, %v202, %v256
    %v273 = vsel %vm241, %v204, %v257
    %v274 = vsel %vm242, %v206, %v258
    %v275 = vsel %vm243, %v208, %v259
    %v276 = vsel %vm244, %v212, %v260
    %v277 = vsel %vm245, %v214, %v261
    %v278 = vsel %vm246, %v216, %v262
    %v279 = vsel %vm247, %v218, %v263
    %v280 = vsel %vm248, %v222, %v264
    %v281 = vsel %vm249, %v224, %v265
    %v282 = vsel %vm250, %v226, %v266
    %v283 = vsel %vm251, %v228, %v267
    %v284 = vsel %vm252, %v232, %v268
    %v285 = vsel %vm253, %v234, %v269
    %v286 = vsel %vm254, %v236, %v270
    %v287 = vsel %vm255, %v238, %v271
    %v288 = vpack.c.bf16 %v274, %v272
    %v289 = vpack.c.bf16 %v275, %v273
    %v290 = vpack.c.bf16 %v278, %v276
    %v291 = vpack.c.bf16 %v279, %v277
    %v292 = vpack.c.bf16 %v282, %v280
    %v293 = vpack.c.bf16 %v283, %v281
    %v294 = vpack.c.bf16 %v286, %v284
    %v295 = vpack.c.bf16 %v287, %v285
    %v296 = vld [vmem:[#allocation9] sm:$0xf]
    %v297 = vld [vmem:[#allocation9 + $0x4] sm:$0xf]
    %v298 = vld [vmem:[#allocation9 + $0x8] sm:$0xf]
    %v299 = vld [vmem:[#allocation9 + $0xc] sm:$0xf]
    %v300 = vld [vmem:[#allocation9 + $0x10] sm:$0xf]
    %v301 = vld [vmem:[#allocation9 + $0x14] sm:$0xf]
    %v302 = vld [vmem:[#allocation9 + $0x18] sm:$0xf]
    %v303 = vld [vmem:[#allocation9 + $0x1c] sm:$0xf]
    %v304 = vld [vmem:[#allocation9 + $0x20] sm:$0xf]
    %v305 = vld [vmem:[#allocation9 + $0x24] sm:$0xf]
    %v306 = vld [vmem:[#allocation9 + $0x28] sm:$0xf]
    %v307 = vld [vmem:[#allocation9 + $0x2c] sm:$0xf]
    %v308 = vld [vmem:[#allocation9 + $0x30] sm:$0xf]
    %v309 = vld [vmem:[#allocation9 + $0x34] sm:$0xf]
    %v310 = vld [vmem:[#allocation9 + $0x38] sm:$0xf]
    %v311 = vld [vmem:[#allocation9 + $0x3c] sm:$0xf]
    %v312 = vld [vmem:[#allocation9 + $0x40] sm:$0xf]
    %v313 = vld [vmem:[#allocation9 + $0x44] sm:$0xf]
    %v314 = vld [vmem:[#allocation9 + $0x48] sm:$0xf]
    %v315 = vld [vmem:[#allocation9 + $0x4c] sm:$0xf]
    %v316 = vld [vmem:[#allocation9 + $0x50] sm:$0xf]
    %v317 = vld [vmem:[#allocation9 + $0x54] sm:$0xf]
    %v318 = vld [vmem:[#allocation9 + $0x58] sm:$0xf]
    %v319 = vld [vmem:[#allocation9 + $0x5c] sm:$0xf]
    %v320 = vld [vmem:[#allocation9 + $0x60] sm:$0xf]
    %v321 = vld [vmem:[#allocation9 + $0x64] sm:$0xf]
    %v322 = vld [vmem:[#allocation9 + $0x68] sm:$0xf]
    %v323 = vld [vmem:[#allocation9 + $0x6c] sm:$0xf]
    %v324 = vld [vmem:[#allocation9 + $0x70] sm:$0xf]
    %v325 = vld [vmem:[#allocation9 + $0x74] sm:$0xf]
    %v326 = vld [vmem:[#allocation9 + $0x78] sm:$0xf]
    %v327 = vld [vmem:[#allocation9 + $0x7c] sm:$0xf]
    %v328 = vld [vmem:[%s4] sm:$0x1]
    %v330 = vlaneseq
    %v331 = vshrl.u32 %v330, 7
    %v332 = vsub.s32 0, %v331
    %v333 = vrot.slane %v328, %v332
    %v367 = vunpack.c.l.b16 %v296
    %v368 = vunpack.c.l.b16 %v297
    %v369 = vunpack.c.l.b16 %v298
    %v370 = vunpack.c.l.b16 %v299
    %v371 = vunpack.c.l.b16 %v300
    %v372 = vunpack.c.l.b16 %v301
    %v373 = vunpack.c.l.b16 %v302
    %v374 = vunpack.c.l.b16 %v303
    %v375 = vunpack.c.l.b16 %v304
    %v376 = vunpack.c.l.b16 %v305
    %v377 = vunpack.c.l.b16 %v306
    %v378 = vunpack.c.l.b16 %v307
    %v379 = vunpack.c.l.b16 %v308
    %v380 = vunpack.c.l.b16 %v309
    %v381 = vunpack.c.l.b16 %v310
    %v382 = vunpack.c.l.b16 %v311
    %v383 = vunpack.c.l.b16 %v312
    %v384 = vunpack.c.l.b16 %v313
    %v385 = vunpack.c.l.b16 %v314
    %v386 = vunpack.c.l.b16 %v315
    %v387 = vunpack.c.l.b16 %v316
    %v388 = vunpack.c.l.b16 %v317
    %v389 = vunpack.c.l.b16 %v318
    %v390 = vunpack.c.l.b16 %v319
    %v391 = vunpack.c.l.b16 %v320
    %v392 = vunpack.c.l.b16 %v321
    %v393 = vunpack.c.l.b16 %v322
    %v394 = vunpack.c.l.b16 %v323
    %v395 = vunpack.c.l.b16 %v324
    %v396 = vunpack.c.l.b16 %v325
    %v397 = vunpack.c.l.b16 %v326
    %v398 = vunpack.c.l.b16 %v327
    %v399 = vpack.c.b16 %v368, %v367
    %v400 = vpack.c.b16 %v370, %v369
    %v401 = vpack.c.b16 %v372, %v371
    %v402 = vpack.c.b16 %v374, %v373
    %v403 = vpack.c.b16 %v376, %v375
    %v404 = vpack.c.b16 %v378, %v377
    %v405 = vpack.c.b16 %v380, %v379
    %v406 = vpack.c.b16 %v382, %v381
    %v407 = vpack.c.b16 %v384, %v383
    %v408 = vpack.c.b16 %v386, %v385
    %v409 = vpack.c.b16 %v388, %v387
    %v410 = vpack.c.b16 %v390, %v389
    %v411 = vpack.c.b16 %v392, %v391
    %v412 = vpack.c.b16 %v394, %v393
    %v413 = vpack.c.b16 %v396, %v395
    %v414 = vpack.c.b16 %v398, %v397
    %431 = vmatprep.subr.bf16.mxu0 0
    %432 = vmatpush1.bf16.msra.mxu0 %v399
    %433 = vmatprep.subr.bf16.mxu0 0
    %434 = vmatpush1.bf16.msra.mxu0 %v400
    %435 = vmatprep.subr.bf16.mxu0 0
    %436 = vmatpush1.bf16.msra.mxu0 %v401
    %437 = vmatprep.subr.bf16.mxu0 0
    %438 = vmatpush1.bf16.msra.mxu0 %v402
    %439 = vmatprep.subr.bf16.mxu0 0
    %440 = vmatpush1.bf16.msra.mxu0 %v403
    %441 = vmatprep.subr.bf16.mxu0 0
    %442 = vmatpush1.bf16.msra.mxu0 %v404
    %443 = vmatprep.subr.bf16.mxu0 0
    %444 = vmatpush1.bf16.msra.mxu0 %v405
    %445 = vmatprep.subr.bf16.mxu0 0
    %446 = vmatpush1.bf16.msra.mxu0 %v406
    %447 = vmatprep.subr.bf16.mxu0 0
    %448 = vmatpush1.bf16.msra.mxu0 %v407
    %449 = vmatprep.subr.bf16.mxu0 0
    %450 = vmatpush1.bf16.msra.mxu0 %v408
    %451 = vmatprep.subr.bf16.mxu0 0
    %452 = vmatpush1.bf16.msra.mxu0 %v409
    %453 = vmatprep.subr.bf16.mxu0 0
    %454 = vmatpush1.bf16.msra.mxu0 %v410
    %455 = vmatprep.subr.bf16.mxu0 0
    %456 = vmatpush1.bf16.msra.mxu0 %v411
    %457 = vmatprep.subr.bf16.mxu0 0
    %458 = vmatpush1.bf16.msra.mxu0 %v412
    %459 = vmatprep.subr.bf16.mxu0 0
    %460 = vmatpush1.bf16.msra.mxu0 %v413
    %461 = vmatprep.subr.bf16.mxu0 0
    %462 = vmatpush1.bf16.msra.mxu0 %v414
    %463 = vmatprep.mubr.bf16.mxu0 %v289
    %464 = vmatmul.mubr.bf16.gmra.mrb[0].mxu0 %v288
    %v465 = vpop.f32.mrb[0].mxu0
    %v466 = vadd.f32 %v333, %v465
    %v467 = vpop.f32.mrb[0].mxu0
    %v468 = vpop.f32.mrb[0].mxu0
    %v469 = vadd.f32 %v333, %v468
    %v470 = vpop.f32.mrb[0].mxu0
    %471 = vmatprep.mubr.bf16.mxu0 %v291
    %472 = vmatmul.mubr.bf16.gmra.mrb[0].mxu0 %v290
    %v473 = vpop.f32.mrb[0].mxu0
    %v474 = vadd.f32 %v333, %v473
    %v475 = vpop.f32.mrb[0].mxu0
    %v476 = vpop.f32.mrb[0].mxu0
    %v477 = vadd.f32 %v333, %v476
    %v478 = vpop.f32.mrb[0].mxu0
    %479 = vmatprep.mubr.bf16.mxu0 %v293
    %480 = vmatmul.mubr.bf16.gmra.mrb[0].mxu0 %v292
    %v481 = vpop.f32.mrb[0].mxu0
    %v482 = vadd.f32 %v333, %v481
    %v483 = vpop.f32.mrb[0].mxu0
    %v484 = vpop.f32.mrb[0].mxu0
    %v485 = vadd.f32 %v333, %v484
    %v486 = vpop.f32.mrb[0].mxu0
    %487 = vmatprep.mubr.bf16.mxu0 %v295
    %488 = vmatmul.mubr.bf16.gmra.mrb[0].mxu0 %v294
    %v489 = vpop.f32.mrb[0].mxu0
    %v490 = vadd.f32 %v333, %v489
    %v491 = vpop.f32.mrb[0].mxu0
    %v492 = vpop.f32.mrb[0].mxu0
    %v493 = vadd.f32 %v333, %v492
    %v494 = vpop.f32.mrb[0].mxu0
    %495 = vdwg.mxu0
    %vm496 = vcmp.ge.f32.partialorder %v466, 0.0
    %vm497 = vcmp.ge.f32.partialorder %v469, 0.0
    %vm498 = vcmp.ge.f32.partialorder %v474, 0.0
    %vm499 = vcmp.ge.f32.partialorder %v477, 0.0
    %vm500 = vcmp.ge.f32.partialorder %v482, 0.0
    %vm501 = vcmp.ge.f32.partialorder %v485, 0.0
    %vm502 = vcmp.ge.f32.partialorder %v490, 0.0
    %vm503 = vcmp.ge.f32.partialorder %v493, 0.0
    %v504 = vmul.f32 %v466, 0.01
    %v505 = vmul.f32 %v469, 0.01
    %v506 = vmul.f32 %v474, 0.01
    %v507 = vmul.f32 %v477, 0.01
    %v508 = vmul.f32 %v482, 0.01
    %v509 = vmul.f32 %v485, 0.01
    %v510 = vmul.f32 %v490, 0.01
    %v511 = vmul.f32 %v493, 0.01
    %v512 = vsel %vm496, %v466, %v504
    %v513 = vsel %vm497, %v469, %v505
    %v514 = vsel %vm498, %v474, %v506
    %v515 = vsel %vm499, %v477, %v507
    %v516 = vsel %vm500, %v482, %v508
    %v517 = vsel %vm501, %v485, %v509
    %v518 = vsel %vm502, %v490, %v510
    %v519 = vsel %vm503, %v493, %v511
    %v520 = vpack.c.bf16 %v513, %v512
    %v521 = vpack.c.bf16 %v515, %v514
    %v522 = vpack.c.bf16 %v517, %v516
    %v523 = vpack.c.bf16 %v519, %v518
    %v524 = vld [vmem:[#allocation10] sm:$0xf]
    %v525 = vld [vmem:[#allocation10 + $0x4] sm:$0xf]
    %v526 = vld [vmem:[#allocation10 + $0x8] sm:$0xf]
    %v527 = vld [vmem:[#allocation10 + $0xc] sm:$0xf]
    %v528 = vld [vmem:[#allocation10 + $0x10] sm:$0xf]
    %v529 = vld [vmem:[#allocation10 + $0x14] sm:$0xf]
    %v530 = vld [vmem:[#allocation10 + $0x18] sm:$0xf]
    %v531 = vld [vmem:[#allocation10 + $0x1c] sm:$0xf]
    %v532 = vld [vmem:[#allocation10 + $0x20] sm:$0xf]
    %v533 = vld [vmem:[#allocation10 + $0x24] sm:$0xf]
    %v534 = vld [vmem:[#allocation10 + $0x28] sm:$0xf]
    %v535 = vld [vmem:[#allocation10 + $0x2c] sm:$0xf]
    %v536 = vld [vmem:[#allocation10 + $0x30] sm:$0xf]
    %v537 = vld [vmem:[#allocation10 + $0x34] sm:$0xf]
    %v538 = vld [vmem:[#allocation10 + $0x38] sm:$0xf]
    %v539 = vld [vmem:[#allocation10 + $0x3c] sm:$0xf]
    %v540 = vld [vmem:[%s6] sm:$0x1]
    %v542 = vlaneseq
    %v543 = vshrl.u32 %v542, 7
    %v544 = vsub.s32 0, %v543
    %v545 = vrot.slane %v540, %v544
    %v563 = vunpack.c.l.b16 %v524
    %v564 = vunpack.c.l.b16 %v525
    %v565 = vunpack.c.l.b16 %v526
    %v566 = vunpack.c.l.b16 %v527
    %v567 = vunpack.c.l.b16 %v528
    %v568 = vunpack.c.l.b16 %v529
    %v569 = vunpack.c.l.b16 %v530
    %v570 = vunpack.c.l.b16 %v531
    %v571 = vunpack.c.l.b16 %v532
    %v572 = vunpack.c.l.b16 %v533
    %v573 = vunpack.c.l.b16 %v534
    %v574 = vunpack.c.l.b16 %v535
    %v575 = vunpack.c.l.b16 %v536
    %v576 = vunpack.c.l.b16 %v537
    %v577 = vunpack.c.l.b16 %v538
    %v578 = vunpack.c.l.b16 %v539
    %v579 = vpack.c.b16 %v564, %v563
    %v580 = vpack.c.b16 %v566, %v565
    %v581 = vpack.c.b16 %v568, %v567
    %v582 = vpack.c.b16 %v570, %v569
    %v583 = vpack.c.b16 %v572, %v571
    %v584 = vpack.c.b16 %v574, %v573
    %v585 = vpack.c.b16 %v576, %v575
    %v586 = vpack.c.b16 %v578, %v577
    %595 = vmatprep.subr.bf16.mxu0 0
    %596 = vmatpush1.bf16.msra.mxu0 %v579
    %597 = vmatprep.subr.bf16.mxu0 0
    %598 = vmatpush1.bf16.msra.mxu0 %v580
    %599 = vmatprep.subr.bf16.mxu0 0
    %600 = vmatpush1.bf16.msra.mxu0 %v581
    %601 = vmatprep.subr.bf16.mxu0 0
    %602 = vmatpush1.bf16.msra.mxu0 %v582
    %603 = vmatprep.subr.bf16.mxu0 0
    %604 = vmatpush1.bf16.msra.mxu0 %v583
    %605 = vmatprep.subr.bf16.mxu0 0
    %606 = vmatpush1.bf16.msra.mxu0 %v584
    %607 = vmatprep.subr.bf16.mxu0 0
    %608 = vmatpush1.bf16.msra.mxu0 %v585
    %609 = vmatprep.subr.bf16.mxu0 0
    %610 = vmatpush1.bf16.msra.mxu0 %v586
    %611 = vmatprep.subr.bf16.mxu0 0
    %612 = vmatpush1.bf16.msra.mxu0 0
    %613 = vmatprep.subr.bf16.mxu0 0
    %614 = vmatpush1.bf16.msra.mxu0 0
    %615 = vmatprep.subr.bf16.mxu0 0
    %616 = vmatpush1.bf16.msra.mxu0 0
    %617 = vmatprep.subr.bf16.mxu0 0
    %618 = vmatpush1.bf16.msra.mxu0 0
    %619 = vmatprep.subr.bf16.mxu0 0
    %620 = vmatpush1.bf16.msra.mxu0 0
    %621 = vmatprep.subr.bf16.mxu0 0
    %622 = vmatpush1.bf16.msra.mxu0 0
    %623 = vmatprep.subr.bf16.mxu0 0
    %624 = vmatpush1.bf16.msra.mxu0 0
    %625 = vmatprep.subr.bf16.mxu0 0
    %626 = vmatpush1.bf16.msra.mxu0 0
    %627 = vmatprep.mubr.bf16.mxu0 0
    %628 = vmatmul.mubr.bf16.gmra.mrb[0].mxu0 %v520
    %v629 = vpop.f32.mrb[0].mxu0
    %v630 = vadd.f32 %v545, %v629
    %v631 = vpop.f32.mrb[0].mxu0
    %v632 = vpop.f32.mrb[0].mxu0
    %v633 = vadd.f32 %v545, %v632
    %v634 = vpop.f32.mrb[0].mxu0
    %635 = vmatprep.mubr.bf16.mxu0 0
    %636 = vmatmul.mubr.bf16.gmra.mrb[0].mxu0 %v521
    %v637 = vpop.f32.mrb[0].mxu0
    %v638 = vadd.f32 %v545, %v637
    %v639 = vpop.f32.mrb[0].mxu0
    %v640 = vpop.f32.mrb[0].mxu0
    %v641 = vadd.f32 %v545, %v640
    %v642 = vpop.f32.mrb[0].mxu0
    %643 = vmatprep.mubr.bf16.mxu0 0
    %644 = vmatmul.mubr.bf16.gmra.mrb[0].mxu0 %v522
    %v645 = vpop.f32.mrb[0].mxu0
    %v646 = vadd.f32 %v545, %v645
    %v647 = vpop.f32.mrb[0].mxu0
    %v648 = vpop.f32.mrb[0].mxu0
    %v649 = vadd.f32 %v545, %v648
    %v650 = vpop.f32.mrb[0].mxu0
    %651 = vmatprep.mubr.bf16.mxu0 0
    %652 = vmatmul.mubr.bf16.gmra.mrb[0].mxu0 %v523
    %v653 = vpop.f32.mrb[0].mxu0
    %v654 = vadd.f32 %v545, %v653
    %v655 = vpop.f32.mrb[0].mxu0
    %v656 = vpop.f32.mrb[0].mxu0
    %v657 = vadd.f32 %v545, %v656
    %v658 = vpop.f32.mrb[0].mxu0
    %659 = vdwg.mxu0
    %660 = vst [vmem:[#allocation2] sm:$0xff] %v630
    %661 = vst [vmem:[#allocation2 + $0x8] sm:$0xff] %v633
    %662 = vst [vmem:[#allocation2 + $0x10] sm:$0xff] %v638
    %663 = vst [vmem:[#allocation2 + $0x18] sm:$0xff] %v641
    %664 = vst [vmem:[#allocation2 + $0x20] sm:$0xff] %v646
    %665 = vst [vmem:[#allocation2 + $0x28] sm:$0xff] %v649
    %666 = vst [vmem:[#allocation2 + $0x30] sm:$0xff] %v654
    %667 = vst [vmem:[#allocation2 + $0x38] sm:$0xff] %v657
    %v668 = vld [vmem:[#allocation12] sm:$0xf]
    %v669 = vld [vmem:[#allocation12 + $0x4] sm:$0xf]
    %v670 = vld [vmem:[#allocation12 + $0x8] sm:$0xf]
    %v671 = vld [vmem:[#allocation12 + $0xc] sm:$0xf]
    %v672 = vld [vmem:[#allocation12 + $0x10] sm:$0xf]
    %v673 = vld [vmem:[#allocation12 + $0x14] sm:$0xf]
    %v674 = vld [vmem:[#allocation12 + $0x18] sm:$0xf]
    %v675 = vld [vmem:[#allocation12 + $0x1c] sm:$0xf]
    %v676 = vld [vmem:[#allocation12 + $0x20] sm:$0xf]
    %v677 = vld [vmem:[#allocation12 + $0x24] sm:$0xf]
    %v678 = vld [vmem:[#allocation12 + $0x28] sm:$0xf]
    %v679 = vld [vmem:[#allocation12 + $0x2c] sm:$0xf]
    %v680 = vld [vmem:[#allocation12 + $0x30] sm:$0xf]
    %v681 = vld [vmem:[#allocation12 + $0x34] sm:$0xf]
    %v682 = vld [vmem:[#allocation12 + $0x38] sm:$0xf]
    %v683 = vld [vmem:[#allocation12 + $0x3c] sm:$0xf]
    %v684 = vld [vmem:[#allocation2] sm:$0xff]
    %v701 = vunpack.c.l.b16 %v668
    %v702 = vunpack.c.l.b16 %v669
    %v703 = vunpack.c.l.b16 %v670
    %v704 = vunpack.c.l.b16 %v671
    %v705 = vunpack.c.l.b16 %v672
    %v706 = vunpack.c.l.b16 %v673
    %v707 = vunpack.c.l.b16 %v674
    %v708 = vunpack.c.l.b16 %v675
    %v709 = vunpack.c.l.b16 %v676
    %v710 = vunpack.c.l.b16 %v677
    %v711 = vunpack.c.l.b16 %v678
    %v712 = vunpack.c.l.b16 %v679
    %v713 = vunpack.c.l.b16 %v680
    %v714 = vunpack.c.l.b16 %v681
    %v715 = vunpack.c.l.b16 %v682
    %v716 = vunpack.c.l.b16 %v683
    %v717 = vpack.c.b16 %v702, %v701
    %v718 = vpack.c.b16 %v704, %v703
    %v719 = vpack.c.b16 %v706, %v705
    %v720 = vpack.c.b16 %v708, %v707
    %v721 = vpack.c.b16 %v710, %v709
    %v722 = vpack.c.b16 %v712, %v711
    %v723 = vpack.c.b16 %v714, %v713
    %v724 = vpack.c.b16 %v716, %v715
    %733 = vmatprep.subr.bf16.mxu0 0
    %734 = vmatpush1.bf16.msra.mxu0 %v717
    %735 = vmatprep.subr.bf16.mxu0 0
    %736 = vmatpush1.bf16.msra.mxu0 %v718
    %737 = vmatprep.subr.bf16.mxu0 0
    %738 = vmatpush1.bf16.msra.mxu0 %v719
    %739 = vmatprep.subr.bf16.mxu0 0
    %740 = vmatpush1.bf16.msra.mxu0 %v720
    %741 = vmatprep.subr.bf16.mxu0 0
    %742 = vmatpush1.bf16.msra.mxu0 %v721
    %743 = vmatprep.subr.bf16.mxu0 0
    %744 = vmatpush1.bf16.msra.mxu0 %v722
    %745 = vmatprep.subr.bf16.mxu0 0
    %746 = vmatpush1.bf16.msra.mxu0 %v723
    %747 = vmatprep.subr.bf16.mxu0 0
    %748 = vmatpush1.bf16.msra.mxu0 %v724
    %749 = vmatprep.subr.bf16.mxu0 0
    %750 = vmatpush1.bf16.msra.mxu0 0
    %751 = vmatprep.subr.bf16.mxu0 0
    %752 = vmatpush1.bf16.msra.mxu0 0
    %753 = vmatprep.subr.bf16.mxu0 0
    %754 = vmatpush1.bf16.msra.mxu0 0
    %755 = vmatprep.subr.bf16.mxu0 0
    %756 = vmatpush1.bf16.msra.mxu0 0
    %757 = vmatprep.subr.bf16.mxu0 0
    %758 = vmatpush1.bf16.msra.mxu0 0
    %759 = vmatprep.subr.bf16.mxu0 0
    %760 = vmatpush1.bf16.msra.mxu0 0
    %761 = vmatprep.subr.bf16.mxu0 0
    %762 = vmatpush1.bf16.msra.mxu0 0
    %763 = vmatprep.subr.bf16.mxu0 0
    %764 = vmatpush1.bf16.msra.mxu0 0
    %765 = vmatprep.mubr.bf16.mxu0 0
    %766 = vmatmul.mubr.bf16.gmra.mrb[0].mxu0 0
    %v767 = vpop.f32.mrb[0].mxu0
    %v768 = vadd.f32 0.0, %v767
    %v769 = vpop.f32.mrb[0].mxu0
    %v770 = vpop.f32.mrb[0].mxu0
    %v771 = vpop.f32.mrb[0].mxu0
    %772 = vdwg.mxu0
    %v773 = vadd.f32 %v684, %v768
    %v774 = vxor.u32 %v773, 2147483648
    %v775 = vmul.f32 %v774, 1.442695
    %v776 = vpow.pop %v775
    %v777 = vadd.f32 %v776, 1.0
    %v778 = vrcp.pop %v777
    %v779 = vmul.f32 1.0, %v778
    %v780 = vtanh.pop %v773
    %781 = vrot.lane.b32.xlu0 %v779, 108
    %v782 = vpop.permute.xlu0 %781
    %783 = vrot.lane.b32.xlu0 %v780, 88
    %v784 = vpop.permute.xlu0 %783
    %785 = vrot.lane.b32.xlu0 %v779, 68
    %v786 = vpop.permute.xlu0 %785
    %v787 = vmul.f32 %v782, 0.0
    %v788 = vmul.f32 %v779, %v784
    %v789 = vadd.f32 %v787, %v788
    %v790 = vtanh.pop %v789
    %v791 = vmul.f32 %v786, %v790
    %792 = vst [vmem:[#allocation3] sm:$0xff] %v791
    %s793 = scalar_lea.vmem [#allocation2], 8
    %v794 = vld [vmem:[%s793] sm:$0xff]
    %v795 = vpack.c.bf16 %v791, %v791
    %796 = vmatprep.subr.bf16.mxu0 0
    %797 = vmatpush1.bf16.msra.mxu0 %v717
    %798 = vmatprep.subr.bf16.mxu0 0
    %799 = vmatpush1.bf16.msra.mxu0 %v718
    %800 = vmatprep.subr.bf16.mxu0 0
    %801 = vmatpush1.bf16.msra.mxu0 %v719
    %802 = vmatprep.subr.bf16.mxu0 0
    %803 = vmatpush1.bf16.msra.mxu0 %v720
    %804 = vmatprep.subr.bf16.mxu0 0
    %805 = vmatpush1.bf16.msra.mxu0 %v721
    %806 = vmatprep.subr.bf16.mxu0 0
    %807 = vmatpush1.bf16.msra.mxu0 %v722
    %808 = vmatprep.subr.bf16.mxu0 0
    %809 = vmatpush1.bf16.msra.mxu0 %v723
    %810 = vmatprep.subr.bf16.mxu0 0
    %811 = vmatpush1.bf16.msra.mxu0 %v724
    %812 = vmatprep.subr.bf16.mxu0 0
    %813 = vmatpush1.bf16.msra.mxu0 0
    %814 = vmatprep.subr.bf16.mxu0 0
    %815 = vmatpush1.bf16.msra.mxu0 0
    %816 = vmatprep.subr.bf16.mxu0 0
    %817 = vmatpush1.bf16.msra.mxu0 0
    %818 = vmatprep.subr.bf16.mxu0 0
    %819 = vmatpush1.bf16.msra.mxu0 0
    %820 = vmatprep.subr.bf16.mxu0 0
    %821 = vmatpush1.bf16.msra.mxu0 0
    %822 = vmatprep.subr.bf16.mxu0 0
    %823 = vmatpush1.bf16.msra.mxu0 0
    %824 = vmatprep.subr.bf16.mxu0 0
    %825 = vmatpush1.bf16.msra.mxu0 0
    %826 = vmatprep.subr.bf16.mxu0 0
    %827 = vmatpush1.bf16.msra.mxu0 0
    %828 = vmatprep.mubr.bf16.mxu0 0
    %829 = vmatmul.mubr.bf16.gmra.mrb[0].mxu0 %v795
    %v830 = vpop.f32.mrb[0].mxu0
    %v831 = vadd.f32 0.0, %v830
    %v832 = vpop.f32.mrb[0].mxu0
    %v833 = vpop.f32.mrb[0].mxu0
    %v834 = vpop.f32.mrb[0].mxu0
    %835 = vdwg.mxu0
    %v836 = vadd.f32 %v794, %v831
    %v837 = vxor.u32 %v836, 2147483648
    %v838 = vmul.f32 %v837, 1.442695
    %v839 = vpow.pop %v838
    %v840 = vadd.f32 %v839, 1.0
    %v841 = vrcp.pop %v840
    %v842 = vmul.f32 1.0, %v841
    %v843 = vtanh.pop %v836
    %844 = vrot.lane.b32.xlu0 %v842, 108
    %v845 = vpop.permute.xlu0 %844
    %846 = vrot.lane.b32.xlu0 %v843, 88
    %v847 = vpop.permute.xlu0 %846
    %848 = vrot.lane.b32.xlu0 %v842, 68
    %v849 = vpop.permute.xlu0 %848
    %v850 = vmul.f32 %v845, %v789
    %v851 = vmul.f32 %v842, %v847
    %v852 = vadd.f32 %v850, %v851
    %v853 = vtanh.pop %v852
    %v854 = vmul.f32 %v849, %v853
    %s855 = scalar_lea.vmem [#allocation3], 8
    %856 = vst [vmem:[%s855] sm:$0xff] %v854
    %s857 = scalar_lea.vmem [#allocation2], 16
    %v858 = vld [vmem:[%s857] sm:$0xff]
    %v859 = vpack.c.bf16 %v854, %v854
    %860 = vmatprep.subr.bf16.mxu0 0
    %861 = vmatpush1.bf16.msra.mxu0 %v717
    %862 = vmatprep.subr.bf16.mxu0 0
    %863 = vmatpush1.bf16.msra.mxu0 %v718
    %864 = vmatprep.subr.bf16.mxu0 0
    %865 = vmatpush1.bf16.msra.mxu0 %v719
    %866 = vmatprep.subr.bf16.mxu0 0
    %867 = vmatpush1.bf16.msra.mxu0 %v720
    %868 = vmatprep.subr.bf16.mxu0 0
    %869 = vmatpush1.bf16.msra.mxu0 %v721
    %870 = vmatprep.subr.bf16.mxu0 0
    %871 = vmatpush1.bf16.msra.mxu0 %v722
    %872 = vmatprep.subr.bf16.mxu0 0
    %873 = vmatpush1.bf16.msra.mxu0 %v723
    %874 = vmatprep.subr.bf16.mxu0 0
    %875 = vmatpush1.bf16.msra.mxu0 %v724
    %876 = vmatprep.subr.bf16.mxu0 0
    %877 = vmatpush1.bf16.msra.mxu0 0
    %878 = vmatprep.subr.bf16.mxu0 0
    %879 = vmatpush1.bf16.msra.mxu0 0
    %880 = vmatprep.subr.bf16.mxu0 0
    %881 = vmatpush1.bf16.msra.mxu0 0
    %882 = vmatprep.subr.bf16.mxu0 0
    %883 = vmatpush1.bf16.msra.mxu0 0
    %884 = vmatprep.subr.bf16.mxu0 0
    %885 = vmatpush1.bf16.msra.mxu0 0
    %886 = vmatprep.subr.bf16.mxu0 0
    %887 = vmatpush1.bf16.msra.mxu0 0
    %888 = vmatprep.subr.bf16.mxu0 0
    %889 = vmatpush1.bf16.msra.mxu0 0
    %890 = vmatprep.subr.bf16.mxu0 0
    %891 = vmatpush1.bf16.msra.mxu0 0
    %892 = vmatprep.mubr.bf16.mxu0 0
    %893 = vmatmul.mubr.bf16.gmra.mrb[0].mxu0 %v859
    %v894 = vpop.f32.mrb[0].mxu0
    %v895 = vadd.f32 0.0, %v894
    %v896 = vpop.f32.mrb[0].mxu0
    %v897 = vpop.f32.mrb[0].mxu0
    %v898 = vpop.f32.mrb[0].mxu0
    %899 = vdwg.mxu0
    %v900 = vadd.f32 %v858, %v895
    %v901 = vxor.u32 %v900, 2147483648
    %v902 = vmul.f32 %v901, 1.442695
    %v903 = vpow.pop %v902
    %v904 = vadd.f32 %v903, 1.0
    %v905 = vrcp.pop %v904
    %v906 = vmul.f32 1.0, %v905
    %v907 = vtanh.pop %v900
    %908 = vrot.lane.b32.xlu0 %v906, 108
    %v909 = vpop.permute.xlu0 %908
    %910 = vrot.lane.b32.xlu0 %v907, 88
    %v911 = vpop.permute.xlu0 %910
    %912 = vrot.lane.b32.xlu0 %v906, 68
    %v913 = vpop.permute.xlu0 %912
    %v914 = vmul.f32 %v909, %v852
    %v915 = vmul.f32 %v906, %v911
    %v916 = vadd.f32 %v914, %v915
    %v917 = vtanh.pop %v916
    %v918 = vmul.f32 %v913, %v917
    %s919 = scalar_lea.vmem [#allocation3], 16
    %920 = vst [vmem:[%s919] sm:$0xff] %v918
    %s921 = scalar_lea.vmem [#allocation2], 24
    %v922 = vld [vmem:[%s921] sm:$0xff]
    %v923 = vpack.c.bf16 %v918, %v918
    %924 = vmatprep.subr.bf16.mxu0 0
    %925 = vmatpush1.bf16.msra.mxu0 %v717
    %926 = vmatprep.subr.bf16.mxu0 0
    %927 = vmatpush1.bf16.msra.mxu0 %v718
    %928 = vmatprep.subr.bf16.mxu0 0
    %929 = vmatpush1.bf16.msra.mxu0 %v719
    %930 = vmatprep.subr.bf16.mxu0 0
    %931 = vmatpush1.bf16.msra.mxu0 %v720
    %932 = vmatprep.subr.bf16.mxu0 0
    %933 = vmatpush1.bf16.msra.mxu0 %v721
    %934 = vmatprep.subr.bf16.mxu0 0
    %935 = vmatpush1.bf16.msra.mxu0 %v722
    %936 = vmatprep.subr.bf16.mxu0 0
    %937 = vmatpush1.bf16.msra.mxu0 %v723
    %938 = vmatprep.subr.bf16.mxu0 0
    %939 = vmatpush1.bf16.msra.mxu0 %v724
    %940 = vmatprep.subr.bf16.mxu0 0
    %941 = vmatpush1.bf16.msra.mxu0 0
    %942 = vmatprep.subr.bf16.mxu0 0
    %943 = vmatpush1.bf16.msra.mxu0 0
    %944 = vmatprep.subr.bf16.mxu0 0
    %945 = vmatpush1.bf16.msra.mxu0 0
    %946 = vmatprep.subr.bf16.mxu0 0
    %947 = vmatpush1.bf16.msra.mxu0 0
    %948 = vmatprep.subr.bf16.mxu0 0
    %949 = vmatpush1.bf16.msra.mxu0 0
    %950 = vmatprep.subr.bf16.mxu0 0
    %951 = vmatpush1.bf16.msra.mxu0 0
    %952 = vmatprep.subr.bf16.mxu0 0
    %953 = vmatpush1.bf16.msra.mxu0 0
    %954 = vmatprep.subr.bf16.mxu0 0
    %955 = vmatpush1.bf16.msra.mxu0 0
    %956 = vmatprep.mubr.bf16.mxu0 0
    %957 = vmatmul.mubr.bf16.gmra.mrb[0].mxu0 %v923
    %v958 = vpop.f32.mrb[0].mxu0
    %v959 = vadd.f32 0.0, %v958
    %v960 = vpop.f32.mrb[0].mxu0
    %v961 = vpop.f32.mrb[0].mxu0
    %v962 = vpop.f32.mrb[0].mxu0
    %963 = vdwg.mxu0
    %v964 = vadd.f32 %v922, %v959
    %v965 = vxor.u32 %v964, 2147483648
    %v966 = vmul.f32 %v965, 1.442695
    %v967 = vpow.pop %v966
    %v968 = vadd.f32 %v967, 1.0
    %v969 = vrcp.pop %v968
    %v970 = vmul.f32 1.0, %v969
    %v971 = vtanh.pop %v964
    %972 = vrot.lane.b32.xlu0 %v970, 108
    %v973 = vpop.permute.xlu0 %972
    %974 = vrot.lane.b32.xlu0 %v971, 88
    %v975 = vpop.permute.xlu0 %974
    %976 = vrot.lane.b32.xlu0 %v970, 68
    %v977 = vpop.permute.xlu0 %976
    %v978 = vmul.f32 %v973, %v916
    %v979 = vmul.f32 %v970, %v975
    %v980 = vadd.f32 %v978, %v979
    %v981 = vtanh.pop %v980
    %v982 = vmul.f32 %v977, %v981
    %s983 = scalar_lea.vmem [#allocation3], 24
    %984 = vst [vmem:[%s983] sm:$0xff] %v982
    %s985 = scalar_lea.vmem [#allocation2], 32
    %v986 = vld [vmem:[%s985] sm:$0xff]
    %v987 = vpack.c.bf16 %v982, %v982
    %988 = vmatprep.subr.bf16.mxu0 0
    %989 = vmatpush1.bf16.msra.mxu0 %v717
    %990 = vmatprep.subr.bf16.mxu0 0
    %991 = vmatpush1.bf16.msra.mxu0 %v718
    %992 = vmatprep.subr.bf16.mxu0 0
    %993 = vmatpush1.bf16.msra.mxu0 %v719
    %994 = vmatprep.subr.bf16.mxu0 0
    %995 = vmatpush1.bf16.msra.mxu0 %v720
    %996 = vmatprep.subr.bf16.mxu0 0
    %997 = vmatpush1.bf16.msra.mxu0 %v721
    %998 = vmatprep.subr.bf16.mxu0 0
    %999 = vmatpush1.bf16.msra.mxu0 %v722
    %1000 = vmatprep.subr.bf16.mxu0 0
    %1001 = vmatpush1.bf16.msra.mxu0 %v723
    %1002 = vmatprep.subr.bf16.mxu0 0
    %1003 = vmatpush1.bf16.msra.mxu0 %v724
    %1004 = vmatprep.subr.bf16.mxu0 0
    %1005 = vmatpush1.bf16.msra.mxu0 0
    %1006 = vmatprep.subr.bf16.mxu0 0
    %1007 = vmatpush1.bf16.msra.mxu0 0
    %1008 = vmatprep.subr.bf16.mxu0 0
    %1009 = vmatpush1.bf16.msra.mxu0 0
    %1010 = vmatprep.subr.bf16.mxu0 0
    %1011 = vmatpush1.bf16.msra.mxu0 0
    %1012 = vmatprep.subr.bf16.mxu0 0
    %1013 = vmatpush1.bf16.msra.mxu0 0
    %1014 = vmatprep.subr.bf16.mxu0 0
    %1015 = vmatpush1.bf16.msra.mxu0 0
    %1016 = vmatprep.subr.bf16.mxu0 0
    %1017 = vmatpush1.bf16.msra.mxu0 0
    %1018 = vmatprep.subr.bf16.mxu0 0
    %1019 = vmatpush1.bf16.msra.mxu0 0
    %1020 = vmatprep.mubr.bf16.mxu0 0
    %1021 = vmatmul.mubr.bf16.gmra.mrb[0].mxu0 %v987
    %v1022 = vpop.f32.mrb[0].mxu0
    %v1023 = vadd.f32 0.0, %v1022
    %v1024 = vpop.f32.mrb[0].mxu0
    %v1025 = vpop.f32.mrb[0].mxu0
    %v1026 = vpop.f32.mrb[0].mxu0
    %1027 = vdwg.mxu0
    %v1028 = vadd.f32 %v986, %v1023
    %v1029 = vxor.u32 %v1028, 2147483648
    %v1030 = vmul.f32 %v1029, 1.442695
    %v1031 = vpow.pop %v1030
    %v1032 = vadd.f32 %v1031, 1.0
    %v1033 = vrcp.pop %v1032
    %v1034 = vmul.f32 1.0, %v1033
    %v1035 = vtanh.pop %v1028
    %1036 = vrot.lane.b32.xlu0 %v1034, 108
    %v1037 = vpop.permute.xlu0 %1036
    %1038 = vrot.lane.b32.xlu0 %v1035, 88
    %v1039 = vpop.permute.xlu0 %1038
    %1040 = vrot.lane.b32.xlu0 %v1034, 68
    %v1041 = vpop.permute.xlu0 %1040
    %v1042 = vmul.f32 %v1037, %v980
    %v1043 = vmul.f32 %v1034, %v1039
    %v1044 = vadd.f32 %v1042, %v1043
    %v1045 = vtanh.pop %v1044
    %v1046 = vmul.f32 %v1041, %v1045
    %s1047 = scalar_lea.vmem [#allocation3], 32
    %1048 = vst [vmem:[%s1047] sm:$0xff] %v1046
    %s1049 = scalar_lea.vmem [#allocation2], 40
    %v1050 = vld [vmem:[%s1049] sm:$0xff]
    %v1051 = vpack.c.bf16 %v1046, %v1046
    %1052 = vmatprep.subr.bf16.mxu0 0
    %1053 = vmatpush1.bf16.msra.mxu0 %v717
    %1054 = vmatprep.subr.bf16.mxu0 0
    %1055 = vmatpush1.bf16.msra.mxu0 %v718
    %1056 = vmatprep.subr.bf16.mxu0 0
    %1057 = vmatpush1.bf16.msra.mxu0 %v719
    %1058 = vmatprep.subr.bf16.mxu0 0
    %1059 = vmatpush1.bf16.msra.mxu0 %v720
    %1060 = vmatprep.subr.bf16.mxu0 0
    %1061 = vmatpush1.bf16.msra.mxu0 %v721
    %1062 = vmatprep.subr.bf16.mxu0 0
    %1063 = vmatpush1.bf16.msra.mxu0 %v722
    %1064 = vmatprep.subr.bf16.mxu0 0
    %1065 = vmatpush1.bf16.msra.mxu0 %v723
    %1066 = vmatprep.subr.bf16.mxu0 0
    %1067 = vmatpush1.bf16.msra.mxu0 %v724
    %1068 = vmatprep.subr.bf16.mxu0 0
    %1069 = vmatpush1.bf16.msra.mxu0 0
    %1070 = vmatprep.subr.bf16.mxu0 0
    %1071 = vmatpush1.bf16.msra.mxu0 0
    %1072 = vmatprep.subr.bf16.mxu0 0
    %1073 = vmatpush1.bf16.msra.mxu0 0
    %1074 = vmatprep.subr.bf16.mxu0 0
    %1075 = vmatpush1.bf16.msra.mxu0 0
    %1076 = vmatprep.subr.bf16.mxu0 0
    %1077 = vmatpush1.bf16.msra.mxu0 0
    %1078 = vmatprep.subr.bf16.mxu0 0
    %1079 = vmatpush1.bf16.msra.mxu0 0
    %1080 = vmatprep.subr.bf16.mxu0 0
    %1081 = vmatpush1.bf16.msra.mxu0 0
    %1082 = vmatprep.subr.bf16.mxu0 0
    %1083 = vmatpush1.bf16.msra.mxu0 0
    %1084 = vmatprep.mubr.bf16.mxu0 0
    %1085 = vmatmul.mubr.bf16.gmra.mrb[0].mxu0 %v1051
    %v1086 = vpop.f32.mrb[0].mxu0
    %v1087 = vadd.f32 0.0, %v1086
    %v1088 = vpop.f32.mrb[0].mxu0
    %v1089 = vpop.f32.mrb[0].mxu0
    %v1090 = vpop.f32.mrb[0].mxu0
    %1091 = vdwg.mxu0
    %v1092 = vadd.f32 %v1050, %v1087
    %v1093 = vxor.u32 %v1092, 2147483648
    %v1094 = vmul.f32 %v1093, 1.442695
    %v1095 = vpow.pop %v1094
    %v1096 = vadd.f32 %v1095, 1.0
    %v1097 = vrcp.pop %v1096
    %v1098 = vmul.f32 1.0, %v1097
    %v1099 = vtanh.pop %v1092
    %1100 = vrot.lane.b32.xlu0 %v1098, 108
    %v1101 = vpop.permute.xlu0 %1100
    %1102 = vrot.lane.b32.xlu0 %v1099, 88
    %v1103 = vpop.permute.xlu0 %1102
    %1104 = vrot.lane.b32.xlu0 %v1098, 68
    %v1105 = vpop.permute.xlu0 %1104
    %v1106 = vmul.f32 %v1101, %v1044
    %v1107 = vmul.f32 %v1098, %v1103
    %v1108 = vadd.f32 %v1106, %v1107
    %v1109 = vtanh.pop %v1108
    %v1110 = vmul.f32 %v1105, %v1109
    %s1111 = scalar_lea.vmem [#allocation3], 40
    %1112 = vst [vmem:[%s1111] sm:$0xff] %v1110
    %s1113 = scalar_lea.vmem [#allocation2], 48
    %v1114 = vld [vmem:[%s1113] sm:$0xff]
    %v1115 = vpack.c.bf16 %v1110, %v1110
    %1116 = vmatprep.subr.bf16.mxu0 0
    %1117 = vmatpush1.bf16.msra.mxu0 %v717
    %1118 = vmatprep.subr.bf16.mxu0 0
    %1119 = vmatpush1.bf16.msra.mxu0 %v718
    %1120 = vmatprep.subr.bf16.mxu0 0
    %1121 = vmatpush1.bf16.msra.mxu0 %v719
    %1122 = vmatprep.subr.bf16.mxu0 0
    %1123 = vmatpush1.bf16.msra.mxu0 %v720
    %1124 = vmatprep.subr.bf16.mxu0 0
    %1125 = vmatpush1.bf16.msra.mxu0 %v721
    %1126 = vmatprep.subr.bf16.mxu0 0
    %1127 = vmatpush1.bf16.msra.mxu0 %v722
    %1128 = vmatprep.subr.bf16.mxu0 0
    %1129 = vmatpush1.bf16.msra.mxu0 %v723
    %1130 = vmatprep.subr.bf16.mxu0 0
    %1131 = vmatpush1.bf16.msra.mxu0 %v724
    %1132 = vmatprep.subr.bf16.mxu0 0
    %1133 = vmatpush1.bf16.msra.mxu0 0
    %1134 = vmatprep.subr.bf16.mxu0 0
    %1135 = vmatpush1.bf16.msra.mxu0 0
    %1136 = vmatprep.subr.bf16.mxu0 0
    %1137 = vmatpush1.bf16.msra.mxu0 0
    %1138 = vmatprep.subr.bf16.mxu0 0
    %1139 = vmatpush1.bf16.msra.mxu0 0
    %1140 = vmatprep.subr.bf16.mxu0 0
    %1141 = vmatpush1.bf16.msra.mxu0 0
    %1142 = vmatprep.subr.bf16.mxu0 0
    %1143 = vmatpush1.bf16.msra.mxu0 0
    %1144 = vmatprep.subr.bf16.mxu0 0
    %1145 = vmatpush1.bf16.msra.mxu0 0
    %1146 = vmatprep.subr.bf16.mxu0 0
    %1147 = vmatpush1.bf16.msra.mxu0 0
    %1148 = vmatprep.mubr.bf16.mxu0 0
    %1149 = vmatmul.mubr.bf16.gmra.mrb[0].mxu0 %v1115
    %v1150 = vpop.f32.mrb[0].mxu0
    %v1151 = vadd.f32 0.0, %v1150
    %v1152 = vpop.f32.mrb[0].mxu0
    %v1153 = vpop.f32.mrb[0].mxu0
    %v1154 = vpop.f32.mrb[0].mxu0
    %1155 = vdwg.mxu0
    %v1156 = vadd.f32 %v1114, %v1151
    %v1157 = vxor.u32 %v1156, 2147483648
    %v1158 = vmul.f32 %v1157, 1.442695
    %v1159 = vpow.pop %v1158
    %v1160 = vadd.f32 %v1159, 1.0
    %v1161 = vrcp.pop %v1160
    %v1162 = vmul.f32 1.0, %v1161
    %v1163 = vtanh.pop %v1156
    %1164 = vrot.lane.b32.xlu0 %v1162, 108
    %v1165 = vpop.permute.xlu0 %1164
    %1166 = vrot.lane.b32.xlu0 %v1163, 88
    %v1167 = vpop.permute.xlu0 %1166
    %1168 = vrot.lane.b32.xlu0 %v1162, 68
    %v1169 = vpop.permute.xlu0 %1168
    %v1170 = vmul.f32 %v1165, %v1108
    %v1171 = vmul.f32 %v1162, %v1167
    %v1172 = vadd.f32 %v1170, %v1171
    %v1173 = vtanh.pop %v1172
    %v1174 = vmul.f32 %v1169, %v1173
    %s1175 = scalar_lea.vmem [#allocation3], 48
    %1176 = vst [vmem:[%s1175] sm:$0xff] %v1174
    %s1177 = scalar_lea.vmem [#allocation2], 56
    %v1178 = vld [vmem:[%s1177] sm:$0xff]
    %v1179 = vpack.c.bf16 %v1174, %v1174
    %1180 = vmatprep.subr.bf16.mxu0 0
    %1181 = vmatpush1.bf16.msra.mxu0 %v717
    %1182 = vmatprep.subr.bf16.mxu0 0
    %1183 = vmatpush1.bf16.msra.mxu0 %v718
    %1184 = vmatprep.subr.bf16.mxu0 0
    %1185 = vmatpush1.bf16.msra.mxu0 %v719
    %1186 = vmatprep.subr.bf16.mxu0 0
    %1187 = vmatpush1.bf16.msra.mxu0 %v720
    %1188 = vmatprep.subr.bf16.mxu0 0
    %1189 = vmatpush1.bf16.msra.mxu0 %v721
    %1190 = vmatprep.subr.bf16.mxu0 0
    %1191 = vmatpush1.bf16.msra.mxu0 %v722
    %1192 = vmatprep.subr.bf16.mxu0 0
    %1193 = vmatpush1.bf16.msra.mxu0 %v723
    %1194 = vmatprep.subr.bf16.mxu0 0
    %1195 = vmatpush1.bf16.msra.mxu0 %v724
    %1196 = vmatprep.subr.bf16.mxu0 0
    %1197 = vmatpush1.bf16.msra.mxu0 0
    %1198 = vmatprep.subr.bf16.mxu0 0
    %1199 = vmatpush1.bf16.msra.mxu0 0
    %1200 = vmatprep.subr.bf16.mxu0 0
    %1201 = vmatpush1.bf16.msra.mxu0 0
    %1202 = vmatprep.subr.bf16.mxu0 0
    %1203 = vmatpush1.bf16.msra.mxu0 0
    %1204 = vmatprep.subr.bf16.mxu0 0
    %1205 = vmatpush1.bf16.msra.mxu0 0
    %1206 = vmatprep.subr.bf16.mxu0 0
    %1207 = vmatpush1.bf16.msra.mxu0 0
    %1208 = vmatprep.subr.bf16.mxu0 0
    %1209 = vmatpush1.bf16.msra.mxu0 0
    %1210 = vmatprep.subr.bf16.mxu0 0
    %1211 = vmatpush1.bf16.msra.mxu0 0
    %1212 = vmatprep.mubr.bf16.mxu0 0
    %1213 = vmatmul.mubr.bf16.gmra.mrb[0].mxu0 %v1179
    %v1214 = vpop.f32.mrb[0].mxu0
    %v1215 = vadd.f32 0.0, %v1214
    %v1216 = vpop.f32.mrb[0].mxu0
    %v1217 = vpop.f32.mrb[0].mxu0
    %v1218 = vpop.f32.mrb[0].mxu0
    %1219 = vdwg.mxu0
    %v1220 = vadd.f32 %v1178, %v1215
    %v1221 = vxor.u32 %v1220, 2147483648
    %v1222 = vmul.f32 %v1221, 1.442695
    %v1223 = vpow.pop %v1222
    %v1224 = vadd.f32 %v1223, 1.0
    %v1225 = vrcp.pop %v1224
    %v1226 = vmul.f32 1.0, %v1225
    %v1227 = vtanh.pop %v1220
    %1228 = vrot.lane.b32.xlu0 %v1226, 108
    %v1229 = vpop.permute.xlu0 %1228
    %1230 = vrot.lane.b32.xlu0 %v1227, 88
    %v1231 = vpop.permute.xlu0 %1230
    %1232 = vrot.lane.b32.xlu0 %v1226, 68
    %v1233 = vpop.permute.xlu0 %1232
    %v1234 = vmul.f32 %v1229, %v1172
    %v1235 = vmul.f32 %v1226, %v1231
    %v1236 = vadd.f32 %v1234, %v1235
    %v1237 = vtanh.pop %v1236
    %v1238 = vmul.f32 %v1233, %v1237
    %s1239 = scalar_lea.vmem [#allocation3], 56
    %1240 = vst [vmem:[%s1239] sm:$0xff] %v1238
    %v1241 = vld [vmem:[#allocation3] sm:$0xff]
    %v1242 = vld [vmem:[#allocation3 + $0x8] sm:$0xff]
    %v1243 = vld [vmem:[#allocation3 + $0x10] sm:$0xff]
    %v1244 = vld [vmem:[#allocation3 + $0x18] sm:$0xff]
    %v1245 = vld [vmem:[#allocation3 + $0x20] sm:$0xff]
    %v1246 = vld [vmem:[#allocation3 + $0x28] sm:$0xff]
    %v1247 = vld [vmem:[#allocation3 + $0x30] sm:$0xff]
    %v1248 = vld [vmem:[#allocation3 + $0x38] sm:$0xff]
    %v1249 = vpack.c.bf16 %v1242, %v1241
    %v1250 = vpack.c.bf16 %v1244, %v1243
    %v1251 = vpack.c.bf16 %v1246, %v1245
    %v1252 = vpack.c.bf16 %v1248, %v1247
    %v1253 = vld [vmem:[#allocation13] sm:$0xf]
    %v1254 = vld [vmem:[#allocation13 + $0x4] sm:$0xf]
    %v1255 = vld [vmem:[#allocation13 + $0x8] sm:$0xf]
    %v1256 = vld [vmem:[#allocation13 + $0xc] sm:$0xf]
    %v1257 = vld [vmem:[#allocation13 + $0x10] sm:$0xf]
    %v1258 = vld [vmem:[#allocation13 + $0x14] sm:$0xf]
    %v1259 = vld [vmem:[#allocation13 + $0x18] sm:$0xf]
    %v1260 = vld [vmem:[#allocation13 + $0x1c] sm:$0xf]
    %v1261 = vld [vmem:[#allocation13 + $0x20] sm:$0xf]
    %v1262 = vld [vmem:[#allocation13 + $0x24] sm:$0xf]
    %v1263 = vld [vmem:[#allocation13 + $0x28] sm:$0xf]
    %v1264 = vld [vmem:[#allocation13 + $0x2c] sm:$0xf]
    %v1265 = vld [vmem:[#allocation13 + $0x30] sm:$0xf]
    %v1266 = vld [vmem:[#allocation13 + $0x34] sm:$0xf]
    %v1267 = vld [vmem:[#allocation13 + $0x38] sm:$0xf]
    %v1268 = vld [vmem:[#allocation13 + $0x3c] sm:$0xf]
    %v1269 = vld [vmem:[%s9] sm:$0x1]
    %v1271 = vlaneseq
    %v1272 = vshrl.u32 %v1271, 7
    %v1273 = vsub.s32 0, %v1272
    %v1274 = vrot.slane %v1269, %v1273
    %v1292 = vunpack.c.l.b16 %v1253
    %v1293 = vunpack.c.l.b16 %v1254
    %v1294 = vunpack.c.l.b16 %v1255
    %v1295 = vunpack.c.l.b16 %v1256
    %v1296 = vunpack.c.l.b16 %v1257
    %v1297 = vunpack.c.l.b16 %v1258
    %v1298 = vunpack.c.l.b16 %v1259
    %v1299 = vunpack.c.l.b16 %v1260
    %v1300 = vunpack.c.l.b16 %v1261
    %v1301 = vunpack.c.l.b16 %v1262
    %v1302 = vunpack.c.l.b16 %v1263
    %v1303 = vunpack.c.l.b16 %v1264
    %v1304 = vunpack.c.l.b16 %v1265
    %v1305 = vunpack.c.l.b16 %v1266
    %v1306 = vunpack.c.l.b16 %v1267
    %v1307 = vunpack.c.l.b16 %v1268
    %v1308 = vpack.c.b16 %v1293, %v1292
    %v1309 = vpack.c.b16 %v1295, %v1294
    %v1310 = vpack.c.b16 %v1297, %v1296
    %v1311 = vpack.c.b16 %v1299, %v1298
    %v1312 = vpack.c.b16 %v1301, %v1300
    %v1313 = vpack.c.b16 %v1303, %v1302
    %v1314 = vpack.c.b16 %v1305, %v1304
    %v1315 = vpack.c.b16 %v1307, %v1306
    %1324 = vmatprep.subr.bf16.mxu0 0
    %1325 = vmatpush1.bf16.msra.mxu0 %v1308
    %1326 = vmatprep.subr.bf16.mxu0 0
    %1327 = vmatpush1.bf16.msra.mxu0 %v1309
    %1328 = vmatprep.subr.bf16.mxu0 0
    %1329 = vmatpush1.bf16.msra.mxu0 %v1310
    %1330 = vmatprep.subr.bf16.mxu0 0
    %1331 = vmatpush1.bf16.msra.mxu0 %v1311
    %1332 = vmatprep.subr.bf16.mxu0 0
    %1333 = vmatpush1.bf16.msra.mxu0 %v1312
    %1334 = vmatprep.subr.bf16.mxu0 0
    %1335 = vmatpush1.bf16.msra.mxu0 %v1313
    %1336 = vmatprep.subr.bf16.mxu0 0
    %1337 = vmatpush1.bf16.msra.mxu0 %v1314
    %1338 = vmatprep.subr.bf16.mxu0 0
    %1339 = vmatpush1.bf16.msra.mxu0 %v1315
    %1340 = vmatprep.subr.bf16.mxu0 0
    %1341 = vmatpush1.bf16.msra.mxu0 0
    %1342 = vmatprep.subr.bf16.mxu0 0
    %1343 = vmatpush1.bf16.msra.mxu0 0
    %1344 = vmatprep.subr.bf16.mxu0 0
    %1345 = vmatpush1.bf16.msra.mxu0 0
    %1346 = vmatprep.subr.bf16.mxu0 0
    %1347 = vmatpush1.bf16.msra.mxu0 0
    %1348 = vmatprep.subr.bf16.mxu0 0
    %1349 = vmatpush1.bf16.msra.mxu0 0
    %1350 = vmatprep.subr.bf16.mxu0 0
    %1351 = vmatpush1.bf16.msra.mxu0 0
    %1352 = vmatprep.subr.bf16.mxu0 0
    %1353 = vmatpush1.bf16.msra.mxu0 0
    %1354 = vmatprep.subr.bf16.mxu0 0
    %1355 = vmatpush1.bf16.msra.mxu0 0
    %1356 = vmatprep.mubr.bf16.mxu0 0
    %1357 = vmatmul.mubr.bf16.gmra.mrb[0].mxu0 %v1249
    %v1358 = vpop.f32.mrb[0].mxu0
    %v1359 = vadd.f32 %v1274, %v1358
    %v1360 = vpop.f32.mrb[0].mxu0
    %v1361 = vpop.f32.mrb[0].mxu0
    %v1362 = vadd.f32 %v1274, %v1361
    %v1363 = vpop.f32.mrb[0].mxu0
    %1364 = vmatprep.mubr.bf16.mxu0 0
    %1365 = vmatmul.mubr.bf16.gmra.mrb[0].mxu0 %v1250
    %v1366 = vpop.f32.mrb[0].mxu0
    %v1367 = vadd.f32 %v1274, %v1366
    %v1368 = vpop.f32.mrb[0].mxu0
    %v1369 = vpop.f32.mrb[0].mxu0
    %v1370 = vadd.f32 %v1274, %v1369
    %v1371 = vpop.f32.mrb[0].mxu0
    %1372 = vmatprep.mubr.bf16.mxu0 0
    %1373 = vmatmul.mubr.bf16.gmra.mrb[0].mxu0 %v1251
    %v1374 = vpop.f32.mrb[0].mxu0
    %v1375 = vadd.f32 %v1274, %v1374
    %v1376 = vpop.f32.mrb[0].mxu0
    %v1377 = vpop.f32.mrb[0].mxu0
    %v1378 = vadd.f32 %v1274, %v1377
    %v1379 = vpop.f32.mrb[0].mxu0
    %1380 = vmatprep.mubr.bf16.mxu0 0
    %1381 = vmatmul.mubr.bf16.gmra.mrb[0].mxu0 %v1252
    %v1382 = vpop.f32.mrb[0].mxu0
    %v1383 = vadd.f32 %v1274, %v1382
    %v1384 = vpop.f32.mrb[0].mxu0
    %v1385 = vpop.f32.mrb[0].mxu0
    %v1386 = vadd.f32 %v1274, %v1385
    %v1387 = vpop.f32.mrb[0].mxu0
    %1388 = vdwg.mxu0
    %1389 = vst [vmem:[#allocation15] sm:$0xff] %v1359
    %1390 = vst [vmem:[#allocation15 + $0x8] sm:$0xff] %v1362
    %1391 = vst [vmem:[#allocation15 + $0x10] sm:$0xff] %v1367
    %1392 = vst [vmem:[#allocation15 + $0x18] sm:$0xff] %v1370
    %1393 = vst [vmem:[#allocation15 + $0x20] sm:$0xff] %v1375
    %1394 = vst [vmem:[#allocation15 + $0x28] sm:$0xff] %v1378
    %1395 = vst [vmem:[#allocation15 + $0x30] sm:$0xff] %v1383
    %1396 = vst [vmem:[#allocation15 + $0x38] sm:$0xff] %v1386
    // Predicated region
    $region66: #{tpu_custom_call.1} parent=1 // pred_check
      _
    $region67: #{tpu_custom_call.1} parent=1 // pred_check_branch
      %1398 = sbr.rel (0) target = $region69
    $region68: #{tpu_custom_call.1} parent=1 // pred_region
      %s1400 = ssub.s32 1024, 1024
      %1401 = vsyncadd [#allocation6], %s1400
      %s1402 = sshll.u32 [#allocation15], 4
      %s1403 = int_to_ptr.vmem [resolvable:$true] %s1402
      %1408 = dma.vmem_to_hbm [thread:$0]  %s1403, 1024, %s10, [#allocation6], 128, 128, 8
    $region69: #{tpu_custom_call.1} parent=1 // pred_fallthru
      _
    // Predicated region
    $region70: #{tpu_custom_call.1} parent=1 // pred_check
      _
    $region71: #{tpu_custom_call.1} parent=1 // pred_check_branch
      %1410 = sbr.rel (0) target = $region73
    $region72: #{tpu_custom_call.1} parent=1 // pred_region
      %1411 = dma.done [#allocation6], 1024
    $region73: #{tpu_custom_call.1} parent=1 // pred_fallthru
      _
    %1412 = vsyncpa [#allocation5], 1
    %1413 = vsyncpa [#allocation8], 1
    %1414 = vsyncpa [#allocation11], 1
    %1415 = vsyncpa [#allocation14], 1
    %1416 = vsyncpa [#allocation6], 1

</llo_original>
